<compile_context>
chip_gen: v7x
topology: tpu7x:2x2x1
jax: 0.10.0
libtpu: 0.0.40
codegen_flags: <defaults>
</compile_context>

<pallas_src>
import functools

import jax
import jax.numpy as jnp
from jax import lax
from jax.experimental import pallas as pl
from jax.experimental.pallas import tpu as pltpu


def _vmem_specs(n):
    return [pl.BlockSpec(memory_space=pltpu.MemorySpace.VMEM) for _ in range(n)]


# --------------------------------------------------------------------------- #
# Kernel 1: per-metapath multi-head graph attention (node projections fused)  #
#           grid axis = edge type ("parallel" -> megacore-shardable)          #
# --------------------------------------------------------------------------- #
def _edge_attn_kernel(heads, xs_ref, xd_ref, ws_ref, bs_ref, wd_ref, bd_ref,
                      as_ref, ad_ref, adj_ref, o_ref):
    bf16, f32 = jnp.bfloat16, jnp.float32

    # node-type projections fused in (recomputed per metapath; trivial vs. a separate
    # pallas_call + HBM round-trip of the projected features)
    xs = jnp.dot(xs_ref[...].astype(bf16), ws_ref[...].astype(bf16),
                 preferred_element_type=f32) + bs_ref[...]                 # [Ns, C]
    xd = jnp.dot(xd_ref[...].astype(bf16), wd_ref[...].astype(bf16),
                 preferred_element_type=f32) + bd_ref[...]                 # [Nd, C]
    adj = adj_ref[...]                                                     # [Nd, Ns]
    xs_b = xs.astype(bf16)

    # per-head attention logits; contract the channel axis directly (no x.T input)
    alpha_s = lax.dot_general(as_ref[...].astype(bf16), xs_b,
                              (((1,), (1,)), ((), ())),
                              preferred_element_type=f32)                  # [H, Ns]
    alpha_d = lax.dot_general(ad_ref[...].astype(bf16), xd.astype(bf16),
                              (((1,), (1,)), ((), ())),
                              preferred_element_type=f32)                  # [H, Nd]

    # all heads at once: [H, Nd, Ns]
    s = alpha_d[:, :, None] + alpha_s[:, None, :]
    s = jnp.where(s >= 0.0, s, 0.2 * s)                                    # leaky_relu(0.2)
    edge = (adj > 0.0)[None, :, :]
    s_m = jnp.where(edge, s, jnp.float32(-1e30))                           # masked logits
    m = jnp.max(s_m, axis=-1, keepdims=True)                               # masked max shift
    e = jnp.exp(s_m - m) * adj[None, :, :]                                 # s_m - m <= 0 always
    den = jnp.sum(e, axis=-1, keepdims=True)
    w = e * pl.reciprocal(jnp.maximum(den, 1e-30), approx=True)            # isolated dst -> 0
    w = w.astype(bf16)

    # per-head aggregation: each head only touches its own d = C/H feature columns
    c = o_ref.shape[-1]
    d = c // heads
    for h in range(heads):                                                 # static unroll (H=8)
        part = jnp.dot(w[h], xs_b[:, h * d:(h + 1) * d],
                       preferred_element_type=f32)                         # [Nd, d]
        o_ref[:, h * d:(h + 1) * d] = jnp.maximum(part, 0.0)               # relu (HANConv)


def edge_attention_pallas(xs, xd, ws, bs, wd, bd, att_s, att_d, adj, *, heads):
    # TODO(synk): for large graphs add an Nd-block grid axis (tile adj/x_dst/out over
    # destination nodes) + vmem_limit_bytes; whole-array dense [Nd, Ns] adjacency is only
    # viable at these toy sizes (it would exceed v7x's 64 MiB VMEM at a few K nodes).
    e_types, nmax, in_ch = xs.shape
    hidden = ws.shape[2]

    def spec(*dims):
        return pl.BlockSpec((None,) + dims, lambda e, _d=dims: (e,) + (0,) * len(_d))

    kernel = functools.partial(_edge_attn_kernel, heads)
    return pl.pallas_call(
        kernel,
        out_shape=jax.ShapeDtypeStruct((e_types, nmax, hidden), jnp.float32),
        grid=(e_types,),
        in_specs=[spec(nmax, in_ch), spec(nmax, in_ch),
                  spec(in_ch, hidden), spec(1, hidden),
                  spec(in_ch, hidden), spec(1, hidden),
                  spec(heads, hidden), spec(heads, hidden),
                  spec(nmax, nmax)],
        out_specs=spec(nmax, hidden),
        compiler_params=pltpu.CompilerParams(dimension_semantics=("parallel",)),
    )(xs, xd, ws, bs, wd, bd, att_s, att_d, adj)


# --------------------------------------------------------------------------- #
# Kernel 2: fused semantic attention + BN/relu/avg-pool/MLP tail              #
# --------------------------------------------------------------------------- #
def _bn_train(v, g, b, eps=1e-5):
    mu = jnp.mean(v, axis=0, keepdims=True)
    var = jnp.mean((v - mu) * (v - mu), axis=0, keepdims=True)             # biased variance
    return (v - mu) * lax.rsqrt(var + eps) * g + b


def _group_mlp_kernel(n_paths, n_nodes, x_ref, q_ref, kw_ref, kb_ref, pool_ref,
                      w1_ref, b1_ref, w2_ref, b2_ref, w3_ref, b3_ref,
                      g1_ref, be1_ref, g2_ref, be2_ref, g3_ref, be3_ref,
                      g4_ref, be4_ref, o_ref):
    bf16, f32 = jnp.bfloat16, jnp.float32
    x = x_ref[...]                                                          # [E*N, C]

    # semantic attention: one hoisted k_lin matmul over all metapaths, q.k as MXU matvec
    k = jnp.tanh(jnp.dot(x.astype(bf16), kw_ref[...].astype(bf16),
                         preferred_element_type=f32) + kb_ref[...])         # [E*N, C]
    sc = jnp.dot(k.astype(bf16), q_ref[...].astype(bf16),
                 preferred_element_type=f32)                                # [E*N, 1]
    inv_n = 1.0 / float(n_nodes)
    scores = [jnp.sum(sc[e * n_nodes:(e + 1) * n_nodes, :], keepdims=True) * inv_n
              for e in range(n_paths)]                                      # static unroll
    m = scores[0]
    for e in range(1, n_paths):
        m = jnp.maximum(m, scores[e])
    exps = [jnp.exp(s - m) for s in scores]
    den = exps[0]
    for e in range(1, n_paths):
        den = den + exps[e]
    inv_den = pl.reciprocal(den, approx=True)
    sem = (exps[0] * inv_den) * x[0:n_nodes, :]
    for e in range(1, n_paths):
        sem = sem + (exps[e] * inv_den) * x[e * n_nodes:(e + 1) * n_nodes, :]

    def ff(v, w_ref, b_ref):
        return jnp.dot(v.astype(bf16), w_ref[...].astype(bf16),
                       preferred_element_type=f32) + b_ref[...]

    h = jnp.maximum(_bn_train(sem, g1_ref[...], be1_ref[...]), 0.0)         # bn1 + relu
    h = jnp.dot(h.astype(bf16), pool_ref[...].astype(bf16),
                preferred_element_type=f32)                                 # AvgPool1d(2)
    h = jnp.maximum(_bn_train(h, g2_ref[...], be2_ref[...]), 0.0)           # bn2 + relu
    h = ff(h, w1_ref, b1_ref)                                               # fc1
    h = jnp.maximum(_bn_train(h, g3_ref[...], be3_ref[...]), 0.0)           # bn3 + relu
    h = ff(h, w2_ref, b2_ref)                                               # fc2
    h = jnp.maximum(_bn_train(h, g3_ref[...], be3_ref[...]), 0.0)           # bn3 reused (matches torch)
    h = ff(h, w3_ref, b3_ref)                                               # fc3 (lane-padded to 128)
    h = jnp.maximum(_bn_train(h, g4_ref[...], be4_ref[...]), 0.0)           # bn4 + relu
    o_ref[...] = h                                                          # single lane-dense store


def group_mlp_pallas(flat, p, *, n_paths, n_nodes):
    kernel = functools.partial(_group_mlp_kernel, n_paths, n_nodes)
    args = (flat, p['q'], p['k_lin_w'], p['k_lin_b'], p['pool'],
            p['fc1_w'], p['fc1_b'], p['fc2_w'], p['fc2_b'], p['fc3_w'], p['fc3_b'],
            p['bn1_g'], p['bn1_b'], p['bn2_g'], p['bn2_b'],
            p['bn3_g'], p['bn3_b'], p['bn4_g'], p['bn4_b'])
    return pl.pallas_call(
        kernel,
        out_shape=jax.ShapeDtypeStruct((n_nodes, p['fc3_w'].shape[1]), jnp.float32),
        in_specs=_vmem_specs(len(args)),
        out_specs=pl.BlockSpec(memory_space=pltpu.MemorySpace.VMEM),
    )(*args)


# --------------------------------------------------------------------------- #
# Parameter construction (deterministic) and forward glue                     #
# --------------------------------------------------------------------------- #
def init_han_params(key, node_types, edge_types, in_channels, hidden, heads, out_pad=128):
    d = hidden // heads
    half = hidden // 2
    keys = iter(jax.random.split(key, 64))
    nrm = lambda shape: 0.1 * jax.random.normal(next(keys), shape, jnp.float32)

    p = {'proj': {}, 'att': {}}
    for nt in node_types:
        p['proj'][nt] = {'w': nrm((in_channels, hidden)), 'b': nrm((1, hidden))}

    # fold the [H, d] per-head attention vectors into masked [H, hidden] rows so each
    # alpha is one dot_general contracting the channel axis
    hmask = jnp.repeat(jnp.eye(heads, dtype=jnp.float32), d, axis=1)        # [H, hidden]
    for et in edge_types:
        name = '__'.join(et)
        p['att'][name] = {
            'src_rows': hmask * nrm((heads, d)).reshape(1, -1),
            'dst_rows': hmask * nrm((heads, d)).reshape(1, -1),
        }

    p['q'] = nrm((hidden, 1))
    p['k_lin_w'] = nrm((hidden, hidden))
    p['k_lin_b'] = nrm((1, hidden))

    # AvgPool1d(kernel_size=2) as a matmul: out[:, k] = 0.5*(x[:, 2k] + x[:, 2k+1])
    p['pool'] = 0.5 * jnp.repeat(jnp.eye(half, dtype=jnp.float32), 2, axis=0)

    p['fc1_w'] = nrm((half, 256)); p['fc1_b'] = nrm((1, 256))
    p['fc2_w'] = nrm((256, 256));  p['fc2_b'] = nrm((1, 256))
    # fc3 / bn4 lane-padded 64 -> 128 so the fused tail stores a lane-dense slab;
    # padded columns stay exactly zero and are sliced off in the wrapper.
    p['fc3_w'] = jnp.pad(nrm((256, 64)), ((0, 0), (0, out_pad - 64)))
    p['fc3_b'] = jnp.pad(nrm((1, 64)), ((0, 0), (0, out_pad - 64)))

    p['bn1_g'] = jnp.ones((1, hidden), jnp.float32); p['bn1_b'] = jnp.zeros((1, hidden), jnp.float32)
    p['bn2_g'] = jnp.ones((1, half), jnp.float32);   p['bn2_b'] = jnp.zeros((1, half), jnp.float32)
    p['bn3_g'] = jnp.ones((1, 256), jnp.float32);    p['bn3_b'] = jnp.zeros((1, 256), jnp.float32)
    p['bn4_g'] = jnp.ones((1, out_pad), jnp.float32); p['bn4_b'] = jnp.zeros((1, out_pad), jnp.float32)
    return p


def han_forward(params, x_dict, edge_index_dict, metadata, heads=8, out_channels=64):
    node_types, edge_types = metadata
    counts = {nt: x_dict[nt].shape[0] for nt in node_types}
    nmax = max(counts.values())

    def pad_rows(a):
        return jnp.pad(a, ((0, nmax - a.shape[0]), (0, 0)))

    # TODO(synk): dense adjacency dedupes repeated (src, dst) edges; PyG's scatter-softmax
    # would count duplicates separately (inputs here only contain unique edges).
    xs_l, xd_l, ws_l, bs_l, wd_l, bd_l, as_l, ad_l, adj_l = ([] for _ in range(9))
    for et in edge_types:
        src, _, dst = et
        name = '__'.join(et)
        ei = edge_index_dict[et]
        xs_l.append(pad_rows(x_dict[src]))
        xd_l.append(pad_rows(x_dict[dst]))
        ws_l.append(params['proj'][src]['w']); bs_l.append(params['proj'][src]['b'])
        wd_l.append(params['proj'][dst]['w']); bd_l.append(params['proj'][dst]['b'])
        as_l.append(params['att'][name]['src_rows'])
        ad_l.append(params['att'][name]['dst_rows'])
        adj_l.append(jnp.zeros((nmax, nmax), jnp.float32).at[ei[1], ei[0]].set(1.0))

    stacked = [jnp.stack(lst, axis=0)
               for lst in (xs_l, xd_l, ws_l, bs_l, wd_l, bd_l, as_l, ad_l, adj_l)]
    out_stack = edge_attention_pallas(*stacked, heads=heads)                # [E, nmax, hidden]

    result = {}
    for nt in node_types:
        idxs = [i for i, et in enumerate(edge_types) if et[2] == nt]
        n = counts[nt]
        flat = jnp.concatenate([out_stack[i, :n, :] for i in idxs], axis=0)  # [E_nt*N, hidden]
        padded = group_mlp_pallas(flat, params, n_paths=len(idxs), n_nodes=n)
        result[nt] = padded[:, :out_channels]
    return result


if __name__ == "__main__":
    key = jax.random.PRNGKey(0)
    node_types = ['author', 'paper']
    edge_types = [('author', 'writes', 'paper'),
                  ('paper', 'rev_writes', 'author'),
                  ('paper', 'cites', 'paper')]
    metadata = (node_types, edge_types)
    in_channels, hidden, heads = 16, 32, 8
    n_nodes = {'author': 12, 'paper': 10}

    k_fa, k_fp, k_e1, k_e2, k_e3, k_par = jax.random.split(key, 6)
    x_dict = {
        'author': jax.random.normal(k_fa, (n_nodes['author'], in_channels), jnp.float32),
        'paper': jax.random.normal(k_fp, (n_nodes['paper'], in_channels), jnp.float32),
    }

    def make_edges(k, n_src, n_dst, n_edges):
        flat = jax.random.choice(k, n_src * n_dst, shape=(n_edges,), replace=False)
        src = (flat % n_src).astype(jnp.int32)
        dst = (flat // n_src).astype(jnp.int32)
        return jnp.stack([src, dst], axis=0)

    edge_index_dict = {
        edge_types[0]: make_edges(k_e1, n_nodes['author'], n_nodes['paper'], 30),
        edge_types[1]: make_edges(k_e2, n_nodes['paper'], n_nodes['author'], 28),
        edge_types[2]: make_edges(k_e3, n_nodes['paper'], n_nodes['paper'], 24),
    }

    params = init_han_params(k_par, node_types, edge_types, in_channels, hidden, heads)

    out = han_forward(params, x_dict, edge_index_dict, metadata, heads=heads)
    out = jax.tree_util.tree_map(lambda a: a.block_until_ready(), out)

    for nt in node_types:
        assert out[nt].shape == (n_nodes[nt], 64), out[nt].shape
        assert bool(jnp.all(jnp.isfinite(out[nt])))
    print("KERNEL_OK")
</pallas_src>

<mosaic_0001>
module attributes {stable_mosaic.version = 11 : i64} {
  func.func @_edge_attn_kernel(%arg0: i32, %arg1: memref<1x12x16xf32, #tpu.memory_space<vmem>>, %arg2: memref<1x12x16xf32, #tpu.memory_space<vmem>>, %arg3: memref<1x16x32xf32, #tpu.memory_space<vmem>>, %arg4: memref<1x1x32xf32, #tpu.memory_space<vmem>>, %arg5: memref<1x16x32xf32, #tpu.memory_space<vmem>>, %arg6: memref<1x1x32xf32, #tpu.memory_space<vmem>>, %arg7: memref<1x8x32xf32, #tpu.memory_space<vmem>>, %arg8: memref<1x8x32xf32, #tpu.memory_space<vmem>>, %arg9: memref<1x12x12xf32, #tpu.memory_space<vmem>>, %arg10: memref<1x12x32xf32, #tpu.memory_space<vmem>>) attributes {dimension_semantics = [#tpu.dimension_semantics<parallel>], iteration_bounds = array<i64: 3>, scalar_prefetch = 0 : i64, scratch_operands = 0 : i64, tpu.core_type = #tpu.core_type<tc>, window_params = [{transform_indices = @transform_0, window_bounds = array<i64: 1, 12, 16>}, {transform_indices = @transform_1, window_bounds = array<i64: 1, 12, 16>}, {transform_indices = @transform_2, window_bounds = array<i64: 1, 16, 32>}, {transform_indices = @transform_3, window_bounds = array<i64: 1, 1, 32>}, {transform_indices = @transform_4, window_bounds = array<i64: 1, 16, 32>}, {transform_indices = @transform_5, window_bounds = array<i64: 1, 1, 32>}, {transform_indices = @transform_6, window_bounds = array<i64: 1, 8, 32>}, {transform_indices = @transform_7, window_bounds = array<i64: 1, 8, 32>}, {transform_indices = @transform_8, window_bounds = array<i64: 1, 12, 12>}, {transform_indices = @transform_9, window_bounds = array<i64: 1, 12, 32>}]} {
    %c0 = arith.constant 0 : index
    %c0_0 = arith.constant 0 : index
    %c0_1 = arith.constant 0 : index
    %0 = vector.load %arg1[%c0, %c0_0, %c0_1] : memref<1x12x16xf32, #tpu.memory_space<vmem>>, vector<1x12x16xf32>
    %1 = vector.shape_cast %0 : vector<1x12x16xf32> to vector<12x16xf32>
    %2 = arith.truncf %1 : vector<12x16xf32> to vector<12x16xbf16>
    %c0_2 = arith.constant 0 : index
    %c0_3 = arith.constant 0 : index
    %c0_4 = arith.constant 0 : index
    %3 = vector.load %arg3[%c0_2, %c0_3, %c0_4] : memref<1x16x32xf32, #tpu.memory_space<vmem>>, vector<1x16x32xf32>
    %4 = vector.shape_cast %3 : vector<1x16x32xf32> to vector<16x32xf32>
    %5 = arith.truncf %4 : vector<16x32xf32> to vector<16x32xbf16>
    %cst = arith.constant dense<0.000000e+00> : vector<12x32xf32>
    %6 = tpu.matmul %2, %5, %cst {dimension_numbers = #tpu.dot_dimension_numbers<[1], [0], [0], [1], [0, 0, 1, 1], [], []>} : vector<12x16xbf16>, vector<16x32xbf16>, vector<12x32xf32> -> vector<12x32xf32>
    %c0_5 = arith.constant 0 : index
    %c0_6 = arith.constant 0 : index
    %c0_7 = arith.constant 0 : index
    %7 = vector.load %arg4[%c0_5, %c0_6, %c0_7] : memref<1x1x32xf32, #tpu.memory_space<vmem>>, vector<1x1x32xf32>
    %8 = vector.shape_cast %7 : vector<1x1x32xf32> to vector<1x32xf32>
    %9 = vector.broadcast %8 : vector<1x32xf32> to vector<12x32xf32>
    %10 = arith.addf %6, %9 : vector<12x32xf32>
    %c0_8 = arith.constant 0 : index
    %c0_9 = arith.constant 0 : index
    %c0_10 = arith.constant 0 : index
    %11 = vector.load %arg2[%c0_8, %c0_9, %c0_10] : memref<1x12x16xf32, #tpu.memory_space<vmem>>, vector<1x12x16xf32>
    %12 = vector.shape_cast %11 : vector<1x12x16xf32> to vector<12x16xf32>
    %13 = arith.truncf %12 : vector<12x16xf32> to vector<12x16xbf16>
    %c0_11 = arith.constant 0 : index
    %c0_12 = arith.constant 0 : index
    %c0_13 = arith.constant 0 : index
    %14 = vector.load %arg5[%c0_11, %c0_12, %c0_13] : memref<1x16x32xf32, #tpu.memory_space<vmem>>, vector<1x16x32xf32>
    %15 = vector.shape_cast %14 : vector<1x16x32xf32> to vector<16x32xf32>
    %16 = arith.truncf %15 : vector<16x32xf32> to vector<16x32xbf16>
    %cst_14 = arith.constant dense<0.000000e+00> : vector<12x32xf32>
    %17 = tpu.matmul %13, %16, %cst_14 {dimension_numbers = #tpu.dot_dimension_numbers<[1], [0], [0], [1], [0, 0, 1, 1], [], []>} : vector<12x16xbf16>, vector<16x32xbf16>, vector<12x32xf32> -> vector<12x32xf32>
    %c0_15 = arith.constant 0 : index
    %c0_16 = arith.constant 0 : index
    %c0_17 = arith.constant 0 : index
    %18 = vector.load %arg6[%c0_15, %c0_16, %c0_17] : memref<1x1x32xf32, #tpu.memory_space<vmem>>, vector<1x1x32xf32>
    %19 = vector.shape_cast %18 : vector<1x1x32xf32> to vector<1x32xf32>
    %20 = vector.broadcast %19 : vector<1x32xf32> to vector<12x32xf32>
    %21 = arith.addf %17, %20 : vector<12x32xf32>
    %c0_18 = arith.constant 0 : index
    %c0_19 = arith.constant 0 : index
    %c0_20 = arith.constant 0 : index
    %22 = vector.load %arg9[%c0_18, %c0_19, %c0_20] : memref<1x12x12xf32, #tpu.memory_space<vmem>>, vector<1x12x12xf32>
    %23 = vector.shape_cast %22 : vector<1x12x12xf32> to vector<12x12xf32>
    %24 = arith.truncf %10 : vector<12x32xf32> to vector<12x32xbf16>
    %c0_21 = arith.constant 0 : index
    %c0_22 = arith.constant 0 : index
    %c0_23 = arith.constant 0 : index
    %25 = vector.load %arg7[%c0_21, %c0_22, %c0_23] : memref<1x8x32xf32, #tpu.memory_space<vmem>>, vector<1x8x32xf32>
    %26 = vector.shape_cast %25 : vector<1x8x32xf32> to vector<8x32xf32>
    %27 = arith.truncf %26 : vector<8x32xf32> to vector<8x32xbf16>
    %cst_24 = arith.constant dense<0.000000e+00> : vector<8x12xf32>
    %28 = tpu.matmul %27, %24, %cst_24 {dimension_numbers = #tpu.dot_dimension_numbers<[1], [1], [0], [0], [0, 0, 1, 0], [], []>} : vector<8x32xbf16>, vector<12x32xbf16>, vector<8x12xf32> -> vector<8x12xf32>
    %c0_25 = arith.constant 0 : index
    %c0_26 = arith.constant 0 : index
    %c0_27 = arith.constant 0 : index
    %29 = vector.load %arg8[%c0_25, %c0_26, %c0_27] : memref<1x8x32xf32, #tpu.memory_space<vmem>>, vector<1x8x32xf32>
    %30 = vector.shape_cast %29 : vector<1x8x32xf32> to vector<8x32xf32>
    %31 = arith.truncf %30 : vector<8x32xf32> to vector<8x32xbf16>
    %32 = arith.truncf %21 : vector<12x32xf32> to vector<12x32xbf16>
    %cst_28 = arith.constant dense<0.000000e+00> : vector<8x12xf32>
    %33 = tpu.matmul %31, %32, %cst_28 {dimension_numbers = #tpu.dot_dimension_numbers<[1], [1], [0], [0], [0, 0, 1, 0], [], []>} : vector<8x32xbf16>, vector<12x32xbf16>, vector<8x12xf32> -> vector<8x12xf32>
    %34 = vector.shape_cast %33 : vector<8x12xf32> to vector<8x12x1xf32>
    %35 = vector.shape_cast %28 : vector<8x12xf32> to vector<8x1x12xf32>
    %36 = vector.broadcast %34 : vector<8x12x1xf32> to vector<8x12x12xf32>
    %37 = vector.broadcast %35 : vector<8x1x12xf32> to vector<8x12x12xf32>
    %38 = arith.addf %36, %37 : vector<8x12x12xf32>
    %cst_29 = arith.constant 0.000000e+00 : f32
    %39 = vector.broadcast %cst_29 : f32 to vector<8x12x12xf32>
    %40 = arith.cmpf oge, %38, %39 : vector<8x12x12xf32>
    %cst_30 = arith.constant 2.000000e-01 : f32
    %41 = vector.broadcast %cst_30 : f32 to vector<8x12x12xf32>
    %42 = arith.mulf %41, %38 : vector<8x12x12xf32>
    %43 = arith.select %40, %38, %42 : vector<8x12x12xi1>, vector<8x12x12xf32>
    %cst_31 = arith.constant 0.000000e+00 : f32
    %44 = vector.broadcast %cst_31 : f32 to vector<12x12xf32>
    %45 = arith.cmpf ogt, %23, %44 : vector<12x12xf32>
    %46 = vector.shape_cast %45 : vector<12x12xi1> to vector<1x12x12xi1>
    %cst_32 = arith.constant -1.000000e+30 : f32
    %47 = vector.shape_cast %46 : vector<1x12x12xi1> to vector<1x12x12xi1>
    %48 = vector.broadcast %47 : vector<1x12x12xi1> to vector<8x12x12xi1>
    %49 = vector.broadcast %cst_32 : f32 to vector<8x12x12xf32>
    %50 = arith.select %48, %43, %49 : vector<8x12x12xi1>, vector<8x12x12xf32>
    %cst_33 = arith.constant dense<0xFF800000> : vector<8x12xf32>
    %51 = vector.multi_reduction <maximumf>, %50, %cst_33 [2] : vector<8x12x12xf32> to vector<8x12xf32>
    %52 = vector.shape_cast %51 : vector<8x12xf32> to vector<8x12x1xf32>
    %53 = vector.broadcast %52 : vector<8x12x1xf32> to vector<8x12x12xf32>
    %54 = arith.subf %50, %53 : vector<8x12x12xf32>
    %55 = math.exp %54 : vector<8x12x12xf32>
    %56 = vector.shape_cast %23 : vector<12x12xf32> to vector<1x12x12xf32>
    %57 = vector.broadcast %56 : vector<1x12x12xf32> to vector<8x12x12xf32>
    %58 = arith.mulf %55, %57 : vector<8x12x12xf32>
    %cst_34 = arith.constant dense<0.000000e+00> : vector<8x12xf32>
    %59 = vector.multi_reduction <add>, %58, %cst_34 [2] : vector<8x12x12xf32> to vector<8x12xf32>
    %60 = vector.shape_cast %59 : vector<8x12xf32> to vector<8x12x1xf32>
    %cst_35 = arith.constant 1.000000e-30 : f32
    %61 = vector.broadcast %cst_35 : f32 to vector<8x12x1xf32>
    %62 = arith.maximumf %60, %61 : vector<8x12x1xf32>
    %63 = tpu.reciprocal %62 {approx = true} : vector<8x12x1xf32> -> vector<8x12x1xf32>
    %64 = vector.broadcast %63 : vector<8x12x1xf32> to vector<8x12x12xf32>
    %65 = arith.mulf %58, %64 : vector<8x12x12xf32>
    %66 = arith.truncf %65 : vector<8x12x12xf32> to vector<8x12x12xbf16>
    %67 = vector.extract_strided_slice %66 {offsets = [0, 0, 0], sizes = [1, 12, 12], strides = [1, 1, 1]} : vector<8x12x12xbf16> to vector<1x12x12xbf16>
    %68 = vector.shape_cast %67 : vector<1x12x12xbf16> to vector<12x12xbf16>
    %69 = vector.extract_strided_slice %24 {offsets = [0, 0], sizes = [12, 4], strides = [1, 1]} : vector<12x32xbf16> to vector<12x4xbf16>
    %cst_36 = arith.constant dense<0.000000e+00> : vector<12x4xf32>
    %70 = tpu.matmul %68, %69, %cst_36 {dimension_numbers = #tpu.dot_dimension_numbers<[1], [0], [0], [1], [0, 0, 1, 1], [], []>} : vector<12x12xbf16>, vector<12x4xbf16>, vector<12x4xf32> -> vector<12x4xf32>
    %cst_37 = arith.constant 0.000000e+00 : f32
    %71 = vector.broadcast %cst_37 : f32 to vector<12x4xf32>
    %72 = arith.maximumf %70, %71 : vector<12x4xf32>
    %c0_38 = arith.constant 0 : index
    %c0_39 = arith.constant 0 : index
    %c0_40 = arith.constant 0 : index
    %73 = vector.load %arg10[%c0_38, %c0_39, %c0_40] : memref<1x12x32xf32, #tpu.memory_space<vmem>>, vector<1x12x4xf32>
    %74 = vector.shape_cast %73 : vector<1x12x4xf32> to vector<12x4xf32>
    %75 = vector.shape_cast %72 : vector<12x4xf32> to vector<1x12x4xf32>
    tpu.vector_store %arg10[%c0_38, %c0_39, %c0_40], %75 {strides = array<i32>} : memref<1x12x32xf32, #tpu.memory_space<vmem>>, vector<1x12x4xf32>,
    %76 = vector.extract_strided_slice %66 {offsets = [1, 0, 0], sizes = [1, 12, 12], strides = [1, 1, 1]} : vector<8x12x12xbf16> to vector<1x12x12xbf16>
    %77 = vector.shape_cast %76 : vector<1x12x12xbf16> to vector<12x12xbf16>
    %78 = vector.extract_strided_slice %24 {offsets = [0, 4], sizes = [12, 4], strides = [1, 1]} : vector<12x32xbf16> to vector<12x4xbf16>
    %cst_41 = arith.constant dense<0.000000e+00> : vector<12x4xf32>
    %79 = tpu.matmul %77, %78, %cst_41 {dimension_numbers = #tpu.dot_dimension_numbers<[1], [0], [0], [1], [0, 0, 1, 1], [], []>} : vector<12x12xbf16>, vector<12x4xbf16>, vector<12x4xf32> -> vector<12x4xf32>
    %cst_42 = arith.constant 0.000000e+00 : f32
    %80 = vector.broadcast %cst_42 : f32 to vector<12x4xf32>
    %81 = arith.maximumf %79, %80 : vector<12x4xf32>
    %c0_43 = arith.constant 0 : index
    %c0_44 = arith.constant 0 : index
    %c4 = arith.constant 4 : index
    %82 = vector.load %arg10[%c0_43, %c0_44, %c4] : memref<1x12x32xf32, #tpu.memory_space<vmem>>, vector<1x12x4xf32>
    %83 = vector.shape_cast %82 : vector<1x12x4xf32> to vector<12x4xf32>
    %84 = vector.shape_cast %81 : vector<12x4xf32> to vector<1x12x4xf32>
    tpu.vector_store %arg10[%c0_43, %c0_44, %c4], %84 {strides = array<i32>} : memref<1x12x32xf32, #tpu.memory_space<vmem>>, vector<1x12x4xf32>,
    %85 = vector.extract_strided_slice %66 {offsets = [2, 0, 0], sizes = [1, 12, 12], strides = [1, 1, 1]} : vector<8x12x12xbf16> to vector<1x12x12xbf16>
    %86 = vector.shape_cast %85 : vector<1x12x12xbf16> to vector<12x12xbf16>
    %87 = vector.extract_strided_slice %24 {offsets = [0, 8], sizes = [12, 4], strides = [1, 1]} : vector<12x32xbf16> to vector<12x4xbf16>
    %cst_45 = arith.constant dense<0.000000e+00> : vector<12x4xf32>
    %88 = tpu.matmul %86, %87, %cst_45 {dimension_numbers = #tpu.dot_dimension_numbers<[1], [0], [0], [1], [0, 0, 1, 1], [], []>} : vector<12x12xbf16>, vector<12x4xbf16>, vector<12x4xf32> -> vector<12x4xf32>
    %cst_46 = arith.constant 0.000000e+00 : f32
    %89 = vector.broadcast %cst_46 : f32 to vector<12x4xf32>
    %90 = arith.maximumf %88, %89 : vector<12x4xf32>
    %c0_47 = arith.constant 0 : index
    %c0_48 = arith.constant 0 : index
    %c8 = arith.constant 8 : index
    %91 = vector.load %arg10[%c0_47, %c0_48, %c8] : memref<1x12x32xf32, #tpu.memory_space<vmem>>, vector<1x12x4xf32>
    %92 = vector.shape_cast %91 : vector<1x12x4xf32> to vector<12x4xf32>
    %93 = vector.shape_cast %90 : vector<12x4xf32> to vector<1x12x4xf32>
    tpu.vector_store %arg10[%c0_47, %c0_48, %c8], %93 {strides = array<i32>} : memref<1x12x32xf32, #tpu.memory_space<vmem>>, vector<1x12x4xf32>,
    %94 = vector.extract_strided_slice %66 {offsets = [3, 0, 0], sizes = [1, 12, 12], strides = [1, 1, 1]} : vector<8x12x12xbf16> to vector<1x12x12xbf16>
    %95 = vector.shape_cast %94 : vector<1x12x12xbf16> to vector<12x12xbf16>
    %96 = vector.extract_strided_slice %24 {offsets = [0, 12], sizes = [12, 4], strides = [1, 1]} : vector<12x32xbf16> to vector<12x4xbf16>
    %cst_49 = arith.constant dense<0.000000e+00> : vector<12x4xf32>
    %97 = tpu.matmul %95, %96, %cst_49 {dimension_numbers = #tpu.dot_dimension_numbers<[1], [0], [0], [1], [0, 0, 1, 1], [], []>} : vector<12x12xbf16>, vector<12x4xbf16>, vector<12x4xf32> -> vector<12x4xf32>
    %cst_50 = arith.constant 0.000000e+00 : f32
    %98 = vector.broadcast %cst_50 : f32 to vector<12x4xf32>
    %99 = arith.maximumf %97, %98 : vector<12x4xf32>
    %c0_51 = arith.constant 0 : index
    %c0_52 = arith.constant 0 : index
    %c12 = arith.constant 12 : index
    %100 = vector.load %arg10[%c0_51, %c0_52, %c12] : memref<1x12x32xf32, #tpu.memory_space<vmem>>, vector<1x12x4xf32>
    %101 = vector.shape_cast %100 : vector<1x12x4xf32> to vector<12x4xf32>
    %102 = vector.shape_cast %99 : vector<12x4xf32> to vector<1x12x4xf32>
    tpu.vector_store %arg10[%c0_51, %c0_52, %c12], %102 {strides = array<i32>} : memref<1x12x32xf32, #tpu.memory_space<vmem>>, vector<1x12x4xf32>,
    %103 = vector.extract_strided_slice %66 {offsets = [4, 0, 0], sizes = [1, 12, 12], strides = [1, 1, 1]} : vector<8x12x12xbf16> to vector<1x12x12xbf16>
    %104 = vector.shape_cast %103 : vector<1x12x12xbf16> to vector<12x12xbf16>
    %105 = vector.extract_strided_slice %24 {offsets = [0, 16], sizes = [12, 4], strides = [1, 1]} : vector<12x32xbf16> to vector<12x4xbf16>
    %cst_53 = arith.constant dense<0.000000e+00> : vector<12x4xf32>
    %106 = tpu.matmul %104, %105, %cst_53 {dimension_numbers = #tpu.dot_dimension_numbers<[1], [0], [0], [1], [0, 0, 1, 1], [], []>} : vector<12x12xbf16>, vector<12x4xbf16>, vector<12x4xf32> -> vector<12x4xf32>
    %cst_54 = arith.constant 0.000000e+00 : f32
    %107 = vector.broadcast %cst_54 : f32 to vector<12x4xf32>
    %108 = arith.maximumf %106, %107 : vector<12x4xf32>
    %c0_55 = arith.constant 0 : index
    %c0_56 = arith.constant 0 : index
    %c16 = arith.constant 16 : index
    %109 = vector.load %arg10[%c0_55, %c0_56, %c16] : memref<1x12x32xf32, #tpu.memory_space<vmem>>, vector<1x12x4xf32>
    %110 = vector.shape_cast %109 : vector<1x12x4xf32> to vector<12x4xf32>
    %111 = vector.shape_cast %108 : vector<12x4xf32> to vector<1x12x4xf32>
    tpu.vector_store %arg10[%c0_55, %c0_56, %c16], %111 {strides = array<i32>} : memref<1x12x32xf32, #tpu.memory_space<vmem>>, vector<1x12x4xf32>,
    %112 = vector.extract_strided_slice %66 {offsets = [5, 0, 0], sizes = [1, 12, 12], strides = [1, 1, 1]} : vector<8x12x12xbf16> to vector<1x12x12xbf16>
    %113 = vector.shape_cast %112 : vector<1x12x12xbf16> to vector<12x12xbf16>
    %114 = vector.extract_strided_slice %24 {offsets = [0, 20], sizes = [12, 4], strides = [1, 1]} : vector<12x32xbf16> to vector<12x4xbf16>
    %cst_57 = arith.constant dense<0.000000e+00> : vector<12x4xf32>
    %115 = tpu.matmul %113, %114, %cst_57 {dimension_numbers = #tpu.dot_dimension_numbers<[1], [0], [0], [1], [0, 0, 1, 1], [], []>} : vector<12x12xbf16>, vector<12x4xbf16>, vector<12x4xf32> -> vector<12x4xf32>
    %cst_58 = arith.constant 0.000000e+00 : f32
    %116 = vector.broadcast %cst_58 : f32 to vector<12x4xf32>
    %117 = arith.maximumf %115, %116 : vector<12x4xf32>
    %c0_59 = arith.constant 0 : index
    %c0_60 = arith.constant 0 : index
    %c20 = arith.constant 20 : index
    %118 = vector.load %arg10[%c0_59, %c0_60, %c20] : memref<1x12x32xf32, #tpu.memory_space<vmem>>, vector<1x12x4xf32>
    %119 = vector.shape_cast %118 : vector<1x12x4xf32> to vector<12x4xf32>
    %120 = vector.shape_cast %117 : vector<12x4xf32> to vector<1x12x4xf32>
    tpu.vector_store %arg10[%c0_59, %c0_60, %c20], %120 {strides = array<i32>} : memref<1x12x32xf32, #tpu.memory_space<vmem>>, vector<1x12x4xf32>,
    %121 = vector.extract_strided_slice %66 {offsets = [6, 0, 0], sizes = [1, 12, 12], strides = [1, 1, 1]} : vector<8x12x12xbf16> to vector<1x12x12xbf16>
    %122 = vector.shape_cast %121 : vector<1x12x12xbf16> to vector<12x12xbf16>
    %123 = vector.extract_strided_slice %24 {offsets = [0, 24], sizes = [12, 4], strides = [1, 1]} : vector<12x32xbf16> to vector<12x4xbf16>
    %cst_61 = arith.constant dense<0.000000e+00> : vector<12x4xf32>
    %124 = tpu.matmul %122, %123, %cst_61 {dimension_numbers = #tpu.dot_dimension_numbers<[1], [0], [0], [1], [0, 0, 1, 1], [], []>} : vector<12x12xbf16>, vector<12x4xbf16>, vector<12x4xf32> -> vector<12x4xf32>
    %cst_62 = arith.constant 0.000000e+00 : f32
    %125 = vector.broadcast %cst_62 : f32 to vector<12x4xf32>
    %126 = arith.maximumf %124, %125 : vector<12x4xf32>
    %c0_63 = arith.constant 0 : index
    %c0_64 = arith.constant 0 : index
    %c24 = arith.constant 24 : index
    %127 = vector.load %arg10[%c0_63, %c0_64, %c24] : memref<1x12x32xf32, #tpu.memory_space<vmem>>, vector<1x12x4xf32>
    %128 = vector.shape_cast %127 : vector<1x12x4xf32> to vector<12x4xf32>
    %129 = vector.shape_cast %126 : vector<12x4xf32> to vector<1x12x4xf32>
    tpu.vector_store %arg10[%c0_63, %c0_64, %c24], %129 {strides = array<i32>} : memref<1x12x32xf32, #tpu.memory_space<vmem>>, vector<1x12x4xf32>,
    %130 = vector.extract_strided_slice %66 {offsets = [7, 0, 0], sizes = [1, 12, 12], strides = [1, 1, 1]} : vector<8x12x12xbf16> to vector<1x12x12xbf16>
    %131 = vector.shape_cast %130 : vector<1x12x12xbf16> to vector<12x12xbf16>
    %132 = vector.extract_strided_slice %24 {offsets = [0, 28], sizes = [12, 4], strides = [1, 1]} : vector<12x32xbf16> to vector<12x4xbf16>
    %cst_65 = arith.constant dense<0.000000e+00> : vector<12x4xf32>
    %133 = tpu.matmul %131, %132, %cst_65 {dimension_numbers = #tpu.dot_dimension_numbers<[1], [0], [0], [1], [0, 0, 1, 1], [], []>} : vector<12x12xbf16>, vector<12x4xbf16>, vector<12x4xf32> -> vector<12x4xf32>
    %cst_66 = arith.constant 0.000000e+00 : f32
    %134 = vector.broadcast %cst_66 : f32 to vector<12x4xf32>
    %135 = arith.maximumf %133, %134 : vector<12x4xf32>
    %c0_67 = arith.constant 0 : index
    %c0_68 = arith.constant 0 : index
    %c28 = arith.constant 28 : index
    %136 = vector.load %arg10[%c0_67, %c0_68, %c28] : memref<1x12x32xf32, #tpu.memory_space<vmem>>, vector<1x12x4xf32>
    %137 = vector.shape_cast %136 : vector<1x12x4xf32> to vector<12x4xf32>
    %138 = vector.shape_cast %135 : vector<12x4xf32> to vector<1x12x4xf32>
    tpu.vector_store %arg10[%c0_67, %c0_68, %c28], %138 {strides = array<i32>} : memref<1x12x32xf32, #tpu.memory_space<vmem>>, vector<1x12x4xf32>,
    return
  }
  func.func @transform_0(%arg0: i32) -> (i32, i32, i32) {
    %c0_i32 = arith.constant 0 : i32
    %c0_i32_0 = arith.constant 0 : i32
    %c0_i32_1 = arith.constant 0 : i32
    return %arg0, %c0_i32, %c0_i32_0 : i32, i32, i32
  }
  func.func @transform_1(%arg0: i32) -> (i32, i32, i32) {
    %c0_i32 = arith.constant 0 : i32
    %c0_i32_0 = arith.constant 0 : i32
    %c0_i32_1 = arith.constant 0 : i32
    return %arg0, %c0_i32, %c0_i32_0 : i32, i32, i32
  }
  func.func @transform_2(%arg0: i32) -> (i32, i32, i32) {
    %c0_i32 = arith.constant 0 : i32
    %c0_i32_0 = arith.constant 0 : i32
    %c0_i32_1 = arith.constant 0 : i32
    return %arg0, %c0_i32, %c0_i32_0 : i32, i32, i32
  }
  func.func @transform_3(%arg0: i32) -> (i32, i32, i32) {
    %c0_i32 = arith.constant 0 : i32
    %c0_i32_0 = arith.constant 0 : i32
    %c0_i32_1 = arith.constant 0 : i32
    return %arg0, %c0_i32, %c0_i32_0 : i32, i32, i32
  }
  func.func @transform_4(%arg0: i32) -> (i32, i32, i32) {
    %c0_i32 = arith.constant 0 : i32
    %c0_i32_0 = arith.constant 0 : i32
    %c0_i32_1 = arith.constant 0 : i32
    return %arg0, %c0_i32, %c0_i32_0 : i32, i32, i32
  }
  func.func @transform_5(%arg0: i32) -> (i32, i32, i32) {
    %c0_i32 = arith.constant 0 : i32
    %c0_i32_0 = arith.constant 0 : i32
    %c0_i32_1 = arith.constant 0 : i32
    return %arg0, %c0_i32, %c0_i32_0 : i32, i32, i32
  }
  func.func @transform_6(%arg0: i32) -> (i32, i32, i32) {
    %c0_i32 = arith.constant 0 : i32
    %c0_i32_0 = arith.constant 0 : i32
    %c0_i32_1 = arith.constant 0 : i32
    return %arg0, %c0_i32, %c0_i32_0 : i32, i32, i32
  }
  func.func @transform_7(%arg0: i32) -> (i32, i32, i32) {
    %c0_i32 = arith.constant 0 : i32
    %c0_i32_0 = arith.constant 0 : i32
    %c0_i32_1 = arith.constant 0 : i32
    return %arg0, %c0_i32, %c0_i32_0 : i32, i32, i32
  }
  func.func @transform_8(%arg0: i32) -> (i32, i32, i32) {
    %c0_i32 = arith.constant 0 : i32
    %c0_i32_0 = arith.constant 0 : i32
    %c0_i32_1 = arith.constant 0 : i32
    return %arg0, %c0_i32, %c0_i32_0 : i32, i32, i32
  }
  func.func @transform_9(%arg0: i32) -> (i32, i32, i32) {
    %c0_i32 = arith.constant 0 : i32
    %c0_i32_0 = arith.constant 0 : i32
    %c0_i32_1 = arith.constant 0 : i32
    return %arg0, %c0_i32, %c0_i32_0 : i32, i32, i32
  }
}

</mosaic_0001>

<llo_original>
// kernel: tpu_custom_call.1
$region0: #{tpu_custom_call.1}
  #allocation0 [shape = 'u32[]', space=smem, size = 0x4, offset = 0x4, fixed_abs, tag = 'smem constant byte address 0x4 - core index']
  #allocation1 [shape = 'u32[144,128]{1,0:T(1,128)}', space=vmem, size = 0x12000, scoped, tag = 'internal scratch']
  %s0 = inlined_call_operand.hbm [shape: f32[3,12,16], index: 0, kind: input, shape index: {}]
  %s1 = inlined_call_operand.hbm [shape: f32[3,12,16], index: 1, kind: input, shape index: {}]
  %s2 = inlined_call_operand.hbm [shape: f32[3,16,32], index: 2, kind: input, shape index: {}]
  %s3 = inlined_call_operand.hbm [shape: f32[3,1,32], index: 3, kind: input, shape index: {}]
  %s4 = inlined_call_operand.hbm [shape: f32[3,16,32], index: 4, kind: input, shape index: {}]
  %s5 = inlined_call_operand.hbm [shape: f32[3,1,32], index: 5, kind: input, shape index: {}]
  %s6 = inlined_call_operand.hbm [shape: f32[3,8,32], index: 6, kind: input, shape index: {}]
  %s7 = inlined_call_operand.vmem [shape: f32[3,8,32], index: 7, kind: input, shape index: {}]
  %s8 = inlined_call_operand.hbm [shape: f32[3,12,12], index: 8, kind: input, shape index: {}]
  %s9 = inlined_call_operand.hbm [shape: f32[3,12,32], index: 9, kind: output, shape index: {}]
  %s10 = sld [smem:[#allocation0]]
  $region101: #{tpu_custom_call.1} parent=0
    _
  %s12 = ssub.s32 1, %s10
  %s13 = scalar_select 0, %s12, %s10
  $region1: #{tpu_custom_call.1} parent=0
    #allocation2 [shape = 'u8[16384]{0}', space=vmem, size = 0x4000, scoped, tag = 'input window, operand 0']
    #allocation3 [shape = 's32[2]{0}', space=sflag, size = 0x8, scoped, tag = 'scoped memory for tpu_custom_call.1']
    #allocation4 [shape = 's32[2]{0}', space=sflag, size = 0x8, scoped, tag = 'scoped memory for tpu_custom_call.1']
    #allocation5 [shape = 'u8[16384]{0}', space=vmem, size = 0x4000, scoped, tag = 'input window, operand 1']
    #allocation6 [shape = 's32[2]{0}', space=sflag, size = 0x8, scoped, tag = 'scoped memory for tpu_custom_call.1']
    #allocation7 [shape = 'u8[16384]{0}', space=vmem, size = 0x4000, scoped, tag = 'input window, operand 2']
    #allocation8 [shape = 'u8[1024]{0}', space=vmem, size = 0x400, scoped, tag = 'input window, operand 3']
    #allocation9 [shape = 's32[2]{0}', space=sflag, size = 0x8, scoped, tag = 'scoped memory for tpu_custom_call.1']
    #allocation10 [shape = 'u8[16384]{0}', space=vmem, size = 0x4000, scoped, tag = 'input window, operand 4']
    #allocation11 [shape = 'u8[1024]{0}', space=vmem, size = 0x400, scoped, tag = 'input window, operand 5']
    #allocation12 [shape = 's32[2]{0}', space=sflag, size = 0x8, scoped, tag = 'scoped memory for tpu_custom_call.1']
    #allocation13 [shape = 'u8[8192]{0}', space=vmem, size = 0x2000, scoped, tag = 'input window, operand 6']
    #allocation14 [shape = 'u8[16384]{0}', space=vmem, size = 0x4000, scoped, tag = 'input window, operand 8']
    #allocation15 [shape = 's32[2]{0}', space=sflag, size = 0x8, scoped, tag = 'scoped memory for tpu_custom_call.1']
    #allocation16 [shape = 'u8[16384]{0}', space=vmem, size = 0x4000, scoped, tag = 'output window, operand 0']
    %14 = vsyncpa [#allocation3], 0
    %s15 = scalar_lea.sflag [#allocation3], 1
    %16 = vsyncpa %s15, 0
    %17 = vsyncpa [#allocation6], 0
    %s18 = scalar_lea.sflag [#allocation6], 1
    %19 = vsyncpa %s18, 0
    %20 = vsyncpa [#allocation9], 0
    %s21 = scalar_lea.sflag [#allocation9], 1
    %22 = vsyncpa %s21, 0
    %23 = vsyncpa [#allocation12], 0
    %s24 = scalar_lea.sflag [#allocation12], 1
    %25 = vsyncpa %s24, 0
    %26 = vsyncpa [#allocation15], 0
    %s27 = scalar_lea.sflag [#allocation15], 1
    %28 = vsyncpa %s27, 0
    %29 = vsyncpa [#allocation4], 0
    %s30 = scalar_lea.sflag [#allocation4], 1
    %31 = vsyncpa %s30, 0
    loop: start=0, step=1, limit=5
    $region2: #{tpu_custom_call.1} parent=1 // loop_pre_header
      _
    $region3: #{tpu_custom_call.1} parent=1 // loop_header
      %s33 = sphi 0, %s37
      %p34 = scmp.ge.s32.totalorder %s33, 5
      %s43 = sphi 0, %s45
      %s46 = sphi 0, %s43
      %s47 = sphi 0, %s46
      %s63 = sphi 0, %s47
      %s69 = sphi 0, %s71
      %s72 = sphi 0, %s69
      %s73 = sphi 0, %s72
      %s89 = sphi 0, %s73
      %s95 = sphi 0, %s97
      %s98 = sphi 0, %s95
      %s99 = sphi 0, %s98
      %s115 = sphi 0, %s99
      %s121 = sphi 0, %s123
      %s124 = sphi 0, %s121
      %s125 = sphi 0, %s124
      %s141 = sphi 0, %s125
      %s147 = sphi 0, %s149
      %s150 = sphi 0, %s147
      %s151 = sphi 0, %s150
      %s167 = sphi 0, %s151
      %s173 = sphi 0, %s175
      %s176 = sphi 0, %s173
      %s177 = sphi 0, %s176
      %s193 = sphi 0, %s177
      %s199 = sphi 0, %s201
      %s202 = sphi 0, %s199
      %s203 = sphi 0, %s202
      %s219 = sphi 0, %s203
      %s225 = sphi 0, %s227
      %s228 = sphi 0, %s225
      %s229 = sphi 0, %s228
      %s245 = sphi 0, %s229
      %s251 = sphi 0, %s253
      %s254 = sphi 0, %s251
      %s255 = sphi 0, %s254
      %s271 = sphi 0, %s255
      %s277 = sphi 0, %s279
      %s280 = sphi 0, %s277
      %s281 = sphi 0, %s280
      %s297 = sphi 0, %s281
    $region4: #{tpu_custom_call.1} parent=1 // loop_header_branch
      %36 = sbr.rel (%p34) target = $region8
    $region5: #{tpu_custom_call.1} parent=1 // loop_body
      %s38 = ssub.s32 %s33, 1
      %s39 = ssub.s32 %s33, 2
      %s40 = sadd.s32 %s33, 1
      %s41 = ssub.s32 %s33, %s40
      %p42 = scmp.eq.s32.totalorder %s41, 0
      %s44 = sadd.s32 %s43, 1
      %s45 = scalar_select %p42, %s43, %s44
      %p48 = pneg %p42
      %p49 = scmp.eq.s32.totalorder %s33, 2
      %p50 = por %p48, %p49
      %p51 = scmp.ne.s32.totalorder %s43, %s46
      %p52 = scmp.eq.s32.totalorder %s33, 0
      %p53 = por %p51, %p52
      %p54 = scmp.ne.s32.totalorder %s43, %s46
      %p55 = scmp.eq.s32.totalorder %s38, 2
      %p56 = por %p54, %p55
      %p57 = scmp.ne.s32.totalorder %s46, %s47
      %p58 = scmp.eq.s32.totalorder %s38, 0
      %p59 = por %p57, %p58
      %p60 = scmp.ne.s32.totalorder %s46, %s47
      %p61 = scmp.eq.s32.totalorder %s39, 2
      %p62 = por %p60, %p61
      %p64 = scmp.ne.s32.totalorder %s47, %s63
      %p65 = scmp.eq.s32.totalorder %s39, 0
      %p66 = por %p64, %p65
      %s67 = ssub.s32 %s33, %s40
      %p68 = scmp.eq.s32.totalorder %s67, 0
      %s70 = sadd.s32 %s69, 1
      %s71 = scalar_select %p68, %s69, %s70
      %p74 = pneg %p68
      %p75 = scmp.eq.s32.totalorder %s33, 2
      %p76 = por %p74, %p75
      %p77 = scmp.ne.s32.totalorder %s69, %s72
      %p78 = scmp.eq.s32.totalorder %s33, 0
      %p79 = por %p77, %p78
      %p80 = scmp.ne.s32.totalorder %s69, %s72
      %p81 = scmp.eq.s32.totalorder %s38, 2
      %p82 = por %p80, %p81
      %p83 = scmp.ne.s32.totalorder %s72, %s73
      %p84 = scmp.eq.s32.totalorder %s38, 0
      %p85 = por %p83, %p84
      %p86 = scmp.ne.s32.totalorder %s72, %s73
      %p87 = scmp.eq.s32.totalorder %s39, 2
      %p88 = por %p86, %p87
      %p90 = scmp.ne.s32.totalorder %s73, %s89
      %p91 = scmp.eq.s32.totalorder %s39, 0
      %p92 = por %p90, %p91
      %s93 = ssub.s32 %s33, %s40
      %p94 = scmp.eq.s32.totalorder %s93, 0
      %s96 = sadd.s32 %s95, 1
      %s97 = scalar_select %p94, %s95, %s96
      %p100 = pneg %p94
      %p101 = scmp.eq.s32.totalorder %s33, 2
      %p102 = por %p100, %p101
      %p103 = scmp.ne.s32.totalorder %s95, %s98
      %p104 = scmp.eq.s32.totalorder %s33, 0
      %p105 = por %p103, %p104
      %p106 = scmp.ne.s32.totalorder %s95, %s98
      %p107 = scmp.eq.s32.totalorder %s38, 2
      %p108 = por %p106, %p107
      %p109 = scmp.ne.s32.totalorder %s98, %s99
      %p110 = scmp.eq.s32.totalorder %s38, 0
      %p111 = por %p109, %p110
      %p112 = scmp.ne.s32.totalorder %s98, %s99
      %p113 = scmp.eq.s32.totalorder %s39, 2
      %p114 = por %p112, %p113
      %p116 = scmp.ne.s32.totalorder %s99, %s115
      %p117 = scmp.eq.s32.totalorder %s39, 0
      %p118 = por %p116, %p117
      %s119 = ssub.s32 %s33, %s40
      %p120 = scmp.eq.s32.totalorder %s119, 0
      %s122 = sadd.s32 %s121, 1
      %s123 = scalar_select %p120, %s121, %s122
      %p126 = pneg %p120
      %p127 = scmp.eq.s32.totalorder %s33, 2
      %p128 = por %p126, %p127
      %p129 = scmp.ne.s32.totalorder %s121, %s124
      %p130 = scmp.eq.s32.totalorder %s33, 0
      %p131 = por %p129, %p130
      %p132 = scmp.ne.s32.totalorder %s121, %s124
      %p133 = scmp.eq.s32.totalorder %s38, 2
      %p134 = por %p132, %p133
      %p135 = scmp.ne.s32.totalorder %s124, %s125
      %p136 = scmp.eq.s32.totalorder %s38, 0
      %p137 = por %p135, %p136
      %p138 = scmp.ne.s32.totalorder %s124, %s125
      %p139 = scmp.eq.s32.totalorder %s39, 2
      %p140 = por %p138, %p139
      %p142 = scmp.ne.s32.totalorder %s125, %s141
      %p143 = scmp.eq.s32.totalorder %s39, 0
      %p144 = por %p142, %p143
      %s145 = ssub.s32 %s33, %s40
      %p146 = scmp.eq.s32.totalorder %s145, 0
      %s148 = sadd.s32 %s147, 1
      %s149 = scalar_select %p146, %s147, %s148
      %p152 = pneg %p146
      %p153 = scmp.eq.s32.totalorder %s33, 2
      %p154 = por %p152, %p153
      %p155 = scmp.ne.s32.totalorder %s147, %s150
      %p156 = scmp.eq.s32.totalorder %s33, 0
      %p157 = por %p155, %p156
      %p158 = scmp.ne.s32.totalorder %s147, %s150
      %p159 = scmp.eq.s32.totalorder %s38, 2
      %p160 = por %p158, %p159
      %p161 = scmp.ne.s32.totalorder %s150, %s151
      %p162 = scmp.eq.s32.totalorder %s38, 0
      %p163 = por %p161, %p162
      %p164 = scmp.ne.s32.totalorder %s150, %s151
      %p165 = scmp.eq.s32.totalorder %s39, 2
      %p166 = por %p164, %p165
      %p168 = scmp.ne.s32.totalorder %s151, %s167
      %p169 = scmp.eq.s32.totalorder %s39, 0
      %p170 = por %p168, %p169
      %s171 = ssub.s32 %s33, %s40
      %p172 = scmp.eq.s32.totalorder %s171, 0
      %s174 = sadd.s32 %s173, 1
      %s175 = scalar_select %p172, %s173, %s174
      %p178 = pneg %p172
      %p179 = scmp.eq.s32.totalorder %s33, 2
      %p180 = por %p178, %p179
      %p181 = scmp.ne.s32.totalorder %s173, %s176
      %p182 = scmp.eq.s32.totalorder %s33, 0
      %p183 = por %p181, %p182
      %p184 = scmp.ne.s32.totalorder %s173, %s176
      %p185 = scmp.eq.s32.totalorder %s38, 2
      %p186 = por %p184, %p185
      %p187 = scmp.ne.s32.totalorder %s176, %s177
      %p188 = scmp.eq.s32.totalorder %s38, 0
      %p189 = por %p187, %p188
      %p190 = scmp.ne.s32.totalorder %s176, %s177
      %p191 = scmp.eq.s32.totalorder %s39, 2
      %p192 = por %p190, %p191
      %p194 = scmp.ne.s32.totalorder %s177, %s193
      %p195 = scmp.eq.s32.totalorder %s39, 0
      %p196 = por %p194, %p195
      %s197 = ssub.s32 %s33, %s40
      %p198 = scmp.eq.s32.totalorder %s197, 0
      %s200 = sadd.s32 %s199, 1
      %s201 = scalar_select %p198, %s199, %s200
      %p204 = pneg %p198
      %p205 = scmp.eq.s32.totalorder %s33, 2
      %p206 = por %p204, %p205
      %p207 = scmp.ne.s32.totalorder %s199, %s202
      %p208 = scmp.eq.s32.totalorder %s33, 0
      %p209 = por %p207, %p208
      %p210 = scmp.ne.s32.totalorder %s199, %s202
      %p211 = scmp.eq.s32.totalorder %s38, 2
      %p212 = por %p210, %p211
      %p213 = scmp.ne.s32.totalorder %s202, %s203
      %p214 = scmp.eq.s32.totalorder %s38, 0
      %p215 = por %p213, %p214
      %p216 = scmp.ne.s32.totalorder %s202, %s203
      %p217 = scmp.eq.s32.totalorder %s39, 2
      %p218 = por %p216, %p217
      %p220 = scmp.ne.s32.totalorder %s203, %s219
      %p221 = scmp.eq.s32.totalorder %s39, 0
      %p222 = por %p220, %p221
      %s223 = ssub.s32 %s33, %s40
      %p224 = scmp.eq.s32.totalorder %s223, 0
      %s226 = sadd.s32 %s225, 1
      %s227 = scalar_select %p224, %s225, %s226
      %p230 = pneg %p224
      %p231 = scmp.eq.s32.totalorder %s33, 2
      %p232 = por %p230, %p231
      %p233 = scmp.ne.s32.totalorder %s225, %s228
      %p234 = scmp.eq.s32.totalorder %s33, 0
      %p235 = por %p233, %p234
      %p236 = scmp.ne.s32.totalorder %s225, %s228
      %p237 = scmp.eq.s32.totalorder %s38, 2
      %p238 = por %p236, %p237
      %p239 = scmp.ne.s32.totalorder %s228, %s229
      %p240 = scmp.eq.s32.totalorder %s38, 0
      %p241 = por %p239, %p240
      %p242 = scmp.ne.s32.totalorder %s228, %s229
      %p243 = scmp.eq.s32.totalorder %s39, 2
      %p244 = por %p242, %p243
      %p246 = scmp.ne.s32.totalorder %s229, %s245
      %p247 = scmp.eq.s32.totalorder %s39, 0
      %p248 = por %p246, %p247
      %s249 = ssub.s32 %s33, %s40
      %p250 = scmp.eq.s32.totalorder %s249, 0
      %s252 = sadd.s32 %s251, 1
      %s253 = scalar_select %p250, %s251, %s252
      %p256 = pneg %p250
      %p257 = scmp.eq.s32.totalorder %s33, 2
      %p258 = por %p256, %p257
      %p259 = scmp.ne.s32.totalorder %s251, %s254
      %p260 = scmp.eq.s32.totalorder %s33, 0
      %p261 = por %p259, %p260
      %p262 = scmp.ne.s32.totalorder %s251, %s254
      %p263 = scmp.eq.s32.totalorder %s38, 2
      %p264 = por %p262, %p263
      %p265 = scmp.ne.s32.totalorder %s254, %s255
      %p266 = scmp.eq.s32.totalorder %s38, 0
      %p267 = por %p265, %p266
      %p268 = scmp.ne.s32.totalorder %s254, %s255
      %p269 = scmp.eq.s32.totalorder %s39, 2
      %p270 = por %p268, %p269
      %p272 = scmp.ne.s32.totalorder %s255, %s271
      %p273 = scmp.eq.s32.totalorder %s39, 0
      %p274 = por %p272, %p273
      %s275 = ssub.s32 %s33, %s40
      %p276 = scmp.eq.s32.totalorder %s275, 0
      %s278 = sadd.s32 %s277, 1
      %s279 = scalar_select %p276, %s277, %s278
      %p282 = pneg %p276
      %p283 = scmp.eq.s32.totalorder %s33, 2
      %p284 = por %p282, %p283
      %p285 = scmp.ne.s32.totalorder %s277, %s280
      %p286 = scmp.eq.s32.totalorder %s33, 0
      %p287 = por %p285, %p286
      %p288 = scmp.ne.s32.totalorder %s277, %s280
      %p289 = scmp.eq.s32.totalorder %s38, 2
      %p290 = por %p288, %p289
      %p291 = scmp.ne.s32.totalorder %s280, %s281
      %p292 = scmp.eq.s32.totalorder %s38, 0
      %p293 = por %p291, %p292
      %p294 = scmp.ne.s32.totalorder %s280, %s281
      %p295 = scmp.eq.s32.totalorder %s39, 2
      %p296 = por %p294, %p295
      %p298 = scmp.ne.s32.totalorder %s281, %s297
      %p299 = scmp.eq.s32.totalorder %s39, 0
      %p300 = por %p298, %p299
      %p301 = scmp.le.s32.totalorder 1, %s33
      %p302 = scmp.lt.s32.totalorder %s33, 4
      %p303 = pnand %p301, %p302
      %p304 = pneg %p303
      // Predicated region
      $region9: #{tpu_custom_call.1} parent=5 // pred_check
        _
      $region10: #{tpu_custom_call.1} parent=5 // pred_check_branch
        %306 = sbr.rel (%p303) target = $region12
      $region11: #{tpu_custom_call.1} parent=5 // pred_region
        %s307 = ssub.s32 %s33, 1
      $region12: #{tpu_custom_call.1} parent=5 // pred_fallthru
        _
      %p308 = scmp.lt.s32.totalorder %s33, 3
      // Predicated region
      $region13: #{tpu_custom_call.1} parent=5 // pred_check
        %p309 = pneg %p308
      $region14: #{tpu_custom_call.1} parent=5 // pred_check_branch
        %311 = sbr.rel (%p309) target = $region16
      $region15: #{tpu_custom_call.1} parent=5 // pred_region
        // Predicated region
        $region17: #{tpu_custom_call.1} parent=15 // pred_check
          %p312 = pneg %p53
        $region18: #{tpu_custom_call.1} parent=15 // pred_check_branch
          %314 = sbr.rel (%p312) target = $region20
        $region19: #{tpu_custom_call.1} parent=15 // pred_region
          %s315 = sand.u32 %s43, 1
          %s316 = scalar_lea.sflag [#allocation3], %s315
          %s317 = sand.u32 %s43, 1
          %s318 = smul.addr %s317, 16
          %s319 = scalar_lea.vmem [#allocation2], %s318
          %s321 = ssub.s32 256, 256
          %322 = vsyncadd %s316, %s321
          %s323 = smul.addr %s33, 2
          %s324 = smul.addr %s323, 128
          %s325 = scalar_lea.hbm %s0, %s324
          %s326 = sshll.u32 %s319, 4
          %s327 = int_to_ptr.vmem [resolvable:$true] %s326
          %332 = dma.hbm_to_vmem [thread:$0]  %s325, 256, %s327, %s316, 128, 128, 8
        $region20: #{tpu_custom_call.1} parent=15 // pred_fallthru
          _
        // Predicated region
        $region21: #{tpu_custom_call.1} parent=15 // pred_check
          %p333 = pneg %p79
        $region22: #{tpu_custom_call.1} parent=15 // pred_check_branch
          %335 = sbr.rel (%p333) target = $region24
        $region23: #{tpu_custom_call.1} parent=15 // pred_region
          %s336 = sand.u32 %s33, 1
          %s337 = scalar_lea.sflag [#allocation6], %s336
          %s338 = sand.u32 %s69, 1
          %s339 = smul.addr %s338, 16
          %s340 = scalar_lea.vmem [#allocation5], %s339
          %s342 = ssub.s32 256, 256
          %343 = vsyncadd %s337, %s342
          %s344 = smul.addr %s33, 2
          %s345 = smul.addr %s344, 128
          %s346 = scalar_lea.hbm %s1, %s345
          %s347 = sshll.u32 %s340, 4
          %s348 = int_to_ptr.vmem [resolvable:$true] %s347
          %353 = dma.hbm_to_vmem [thread:$0]  %s346, 256, %s348, %s337, 128, 128, 8
        $region24: #{tpu_custom_call.1} parent=15 // pred_fallthru
          _
        // Predicated region
        $region25: #{tpu_custom_call.1} parent=15 // pred_check
          %p354 = pneg %p105
        $region26: #{tpu_custom_call.1} parent=15 // pred_check_branch
          %356 = sbr.rel (%p354) target = $region28
        $region27: #{tpu_custom_call.1} parent=15 // pred_region
          %s357 = sand.u32 %s33, 1
          %s358 = scalar_lea.sflag [#allocation6], %s357
          %s359 = sand.u32 %s95, 1
          %s360 = smul.addr %s359, 16
          %s361 = scalar_lea.vmem [#allocation7], %s360
          %s363 = ssub.s32 256, 256
          %364 = vsyncadd %s358, %s363
          %s365 = smul.addr %s33, 2
          %s366 = smul.addr %s365, 128
          %s367 = scalar_lea.hbm %s2, %s366
          %s368 = sshll.u32 %s361, 4
          %s369 = int_to_ptr.vmem [resolvable:$true] %s368
          %374 = dma.hbm_to_vmem [thread:$0]  %s367, 256, %s369, %s358, 128, 128, 8
        $region28: #{tpu_custom_call.1} parent=15 // pred_fallthru
          _
        // Predicated region
        $region29: #{tpu_custom_call.1} parent=15 // pred_check
          %p375 = pneg %p131
        $region30: #{tpu_custom_call.1} parent=15 // pred_check_branch
          %377 = sbr.rel (%p375) target = $region32
        $region31: #{tpu_custom_call.1} parent=15 // pred_region
          %s378 = sand.u32 %s33, 1
          %s379 = scalar_lea.sflag [#allocation9], %s378
          %s380 = sand.u32 %s121, 1
          %s381 = scalar_lea.vmem [#allocation8], %s380
          %s383 = ssub.s32 16, 16
          %384 = vsyncadd %s379, %s383
          %s385 = smul.addr %s33, 16
          %s386 = scalar_lea.hbm %s3, %s385
          %s388 = sshll.u32 %s381, 4
          %s389 = int_to_ptr.vmem [resolvable:$true] %s388
          %391 = dma.hbm_to_vmem [thread:$0]  %s386, 16, %s389, %s379
        $region32: #{tpu_custom_call.1} parent=15 // pred_fallthru
          _
        // Predicated region
        $region33: #{tpu_custom_call.1} parent=15 // pred_check
          %p392 = pneg %p157
        $region34: #{tpu_custom_call.1} parent=15 // pred_check_branch
          %394 = sbr.rel (%p392) target = $region36
        $region35: #{tpu_custom_call.1} parent=15 // pred_region
          %s395 = sand.u32 %s33, 1
          %s396 = scalar_lea.sflag [#allocation9], %s395
          %s397 = sand.u32 %s147, 1
          %s398 = smul.addr %s397, 16
          %s399 = scalar_lea.vmem [#allocation10], %s398
          %s401 = ssub.s32 256, 256
          %402 = vsyncadd %s396, %s401
          %s403 = smul.addr %s33, 2
          %s404 = smul.addr %s403, 128
          %s405 = scalar_lea.hbm %s4, %s404
          %s406 = sshll.u32 %s399, 4
          %s407 = int_to_ptr.vmem [resolvable:$true] %s406
          %412 = dma.hbm_to_vmem [thread:$0]  %s405, 256, %s407, %s396, 128, 128, 8
        $region36: #{tpu_custom_call.1} parent=15 // pred_fallthru
          _
        // Predicated region
        $region37: #{tpu_custom_call.1} parent=15 // pred_check
          %p413 = pneg %p183
        $region38: #{tpu_custom_call.1} parent=15 // pred_check_branch
          %415 = sbr.rel (%p413) target = $region40
        $region39: #{tpu_custom_call.1} parent=15 // pred_region
          %s416 = sand.u32 %s33, 1
          %s417 = scalar_lea.sflag [#allocation12], %s416
          %s418 = sand.u32 %s173, 1
          %s419 = scalar_lea.vmem [#allocation11], %s418
          %s421 = ssub.s32 16, 16
          %422 = vsyncadd %s417, %s421
          %s423 = smul.addr %s33, 16
          %s424 = scalar_lea.hbm %s5, %s423
          %s426 = sshll.u32 %s419, 4
          %s427 = int_to_ptr.vmem [resolvable:$true] %s426
          %429 = dma.hbm_to_vmem [thread:$0]  %s424, 16, %s427, %s417
        $region40: #{tpu_custom_call.1} parent=15 // pred_fallthru
          _
        // Predicated region
        $region41: #{tpu_custom_call.1} parent=15 // pred_check
          %p430 = pneg %p209
        $region42: #{tpu_custom_call.1} parent=15 // pred_check_branch
          %432 = sbr.rel (%p430) target = $region44
        $region43: #{tpu_custom_call.1} parent=15 // pred_region
          %s433 = sand.u32 %s33, 1
          %s434 = scalar_lea.sflag [#allocation12], %s433
          %s435 = sand.u32 %s199, 1
          %s436 = smul.addr %s435, 8
          %s437 = scalar_lea.vmem [#allocation13], %s436
          %s439 = ssub.s32 128, 128
          %440 = vsyncadd %s434, %s439
          %s441 = smul.addr %s33, 128
          %s442 = scalar_lea.hbm %s6, %s441
          %s444 = sshll.u32 %s437, 4
          %s445 = int_to_ptr.vmem [resolvable:$true] %s444
          %447 = dma.hbm_to_vmem [thread:$0]  %s442, 128, %s445, %s434
        $region44: #{tpu_custom_call.1} parent=15 // pred_fallthru
          _
        // Predicated region
        $region45: #{tpu_custom_call.1} parent=15 // pred_check
          %p448 = pneg %p235
        $region46: #{tpu_custom_call.1} parent=15 // pred_check_branch
          %450 = sbr.rel (%p448) target = $region48
        $region47: #{tpu_custom_call.1} parent=15 // pred_region
          %p451 = scmp.lt.s32.totalorder %s33, 2
          %s452 = scalar_select %p451, %s33, 2
          %s453 = smul.addr %s452, 8
          %s454 = scalar_lea.vmem %s7, %s453
        $region48: #{tpu_custom_call.1} parent=15 // pred_fallthru
          _
        // Predicated region
        $region49: #{tpu_custom_call.1} parent=15 // pred_check
          %p455 = pneg %p261
        $region50: #{tpu_custom_call.1} parent=15 // pred_check_branch
          %457 = sbr.rel (%p455) target = $region52
        $region51: #{tpu_custom_call.1} parent=15 // pred_region
          %s458 = sand.u32 %s251, 1
          %s459 = scalar_lea.sflag [#allocation15], %s458
          %s460 = sand.u32 %s251, 1
          %s461 = smul.addr %s460, 16
          %s462 = scalar_lea.vmem [#allocation14], %s461
          %s464 = ssub.s32 256, 256
          %465 = vsyncadd %s459, %s464
          %s466 = smul.addr %s33, 2
          %s467 = smul.addr %s466, 128
          %s468 = scalar_lea.hbm %s8, %s467
          %s469 = sshll.u32 %s462, 4
          %s470 = int_to_ptr.vmem [resolvable:$true] %s469
          %475 = dma.hbm_to_vmem [thread:$0]  %s468, 256, %s470, %s459, 128, 128, 8
        $region52: #{tpu_custom_call.1} parent=15 // pred_fallthru
          _
      $region16: #{tpu_custom_call.1} parent=5 // pred_fallthru
        _
      %p476 = scmp.le.s32.totalorder 1, %s33
      %p477 = scmp.lt.s32.totalorder %s33, 4
      %p478 = pnand %p476, %p477
      %p479 = pneg %p478
      // Predicated region
      $region53: #{tpu_custom_call.1} parent=5 // pred_check
        _
      $region54: #{tpu_custom_call.1} parent=5 // pred_check_branch
        %481 = sbr.rel (%p478) target = $region56
      $region55: #{tpu_custom_call.1} parent=5 // pred_region
        %s482 = ssub.s32 %s33, 1
        %s483 = sand.u32 %s46, 1
        %s484 = scalar_lea.sflag [#allocation3], %s483
        %s485 = sand.u32 %s46, 1
        %s486 = smul.addr %s485, 16
        %s487 = scalar_lea.vmem [#allocation2], %s486
        // Predicated region
        $region57: #{tpu_custom_call.1} parent=55 // pred_check
          %p488 = pneg %p59
        $region58: #{tpu_custom_call.1} parent=55 // pred_check_branch
          %490 = sbr.rel (%p488) target = $region60
        $region59: #{tpu_custom_call.1} parent=55 // pred_region
          %491 = dma.done %s484, 256
        $region60: #{tpu_custom_call.1} parent=55 // pred_fallthru
          _
        %s492 = sand.u32 %s38, 1
        %s493 = scalar_lea.sflag [#allocation6], %s492
        %s494 = sand.u32 %s72, 1
        %s495 = smul.addr %s494, 16
        %s496 = scalar_lea.vmem [#allocation5], %s495
        // Predicated region
        $region61: #{tpu_custom_call.1} parent=55 // pred_check
          %p497 = pneg %p85
        $region62: #{tpu_custom_call.1} parent=55 // pred_check_branch
          %499 = sbr.rel (%p497) target = $region64
        $region63: #{tpu_custom_call.1} parent=55 // pred_region
          %500 = dma.done %s493, 256
        $region64: #{tpu_custom_call.1} parent=55 // pred_fallthru
          _
        %s501 = sand.u32 %s38, 1
        %s502 = scalar_lea.sflag [#allocation6], %s501
        %s503 = sand.u32 %s98, 1
        %s504 = smul.addr %s503, 16
        %s505 = scalar_lea.vmem [#allocation7], %s504
        // Predicated region
        $region65: #{tpu_custom_call.1} parent=55 // pred_check
          %p506 = pneg %p111
        $region66: #{tpu_custom_call.1} parent=55 // pred_check_branch
          %508 = sbr.rel (%p506) target = $region68
        $region67: #{tpu_custom_call.1} parent=55 // pred_region
          %509 = dma.done %s502, 256
        $region68: #{tpu_custom_call.1} parent=55 // pred_fallthru
          _
        %s510 = sand.u32 %s38, 1
        %s511 = scalar_lea.sflag [#allocation9], %s510
        %s512 = sand.u32 %s124, 1
        %s513 = scalar_lea.vmem [#allocation8], %s512
        // Predicated region
        $region69: #{tpu_custom_call.1} parent=55 // pred_check
          %p514 = pneg %p137
        $region70: #{tpu_custom_call.1} parent=55 // pred_check_branch
          %516 = sbr.rel (%p514) target = $region72
        $region71: #{tpu_custom_call.1} parent=55 // pred_region
          %517 = dma.done %s511, 16
        $region72: #{tpu_custom_call.1} parent=55 // pred_fallthru
          _
        %s518 = sand.u32 %s38, 1
        %s519 = scalar_lea.sflag [#allocation9], %s518
        %s520 = sand.u32 %s150, 1
        %s521 = smul.addr %s520, 16
        %s522 = scalar_lea.vmem [#allocation10], %s521
        // Predicated region
        $region73: #{tpu_custom_call.1} parent=55 // pred_check
          %p523 = pneg %p163
        $region74: #{tpu_custom_call.1} parent=55 // pred_check_branch
          %525 = sbr.rel (%p523) target = $region76
        $region75: #{tpu_custom_call.1} parent=55 // pred_region
          %526 = dma.done %s519, 256
        $region76: #{tpu_custom_call.1} parent=55 // pred_fallthru
          _
        %s527 = sand.u32 %s38, 1
        %s528 = scalar_lea.sflag [#allocation12], %s527
        %s529 = sand.u32 %s176, 1
        %s530 = scalar_lea.vmem [#allocation11], %s529
        // Predicated region
        $region77: #{tpu_custom_call.1} parent=55 // pred_check
          %p531 = pneg %p189
        $region78: #{tpu_custom_call.1} parent=55 // pred_check_branch
          %533 = sbr.rel (%p531) target = $region80
        $region79: #{tpu_custom_call.1} parent=55 // pred_region
          %534 = dma.done %s528, 16
        $region80: #{tpu_custom_call.1} parent=55 // pred_fallthru
          _
        %s535 = sand.u32 %s38, 1
        %s536 = scalar_lea.sflag [#allocation12], %s535
        %s537 = sand.u32 %s202, 1
        %s538 = smul.addr %s537, 8
        %s539 = scalar_lea.vmem [#allocation13], %s538
        // Predicated region
        $region81: #{tpu_custom_call.1} parent=55 // pred_check
          %p540 = pneg %p215
        $region82: #{tpu_custom_call.1} parent=55 // pred_check_branch
          %542 = sbr.rel (%p540) target = $region84
        $region83: #{tpu_custom_call.1} parent=55 // pred_region
          %543 = dma.done %s536, 128
        $region84: #{tpu_custom_call.1} parent=55 // pred_fallthru
          _
        %s544 = sand.u32 %s254, 1
        %s545 = scalar_lea.sflag [#allocation15], %s544
        %s546 = sand.u32 %s254, 1
        %s547 = smul.addr %s546, 16
        %s548 = scalar_lea.vmem [#allocation14], %s547
        // Predicated region
        $region85: #{tpu_custom_call.1} parent=55 // pred_check
          %p549 = pneg %p267
        $region86: #{tpu_custom_call.1} parent=55 // pred_check_branch
          %551 = sbr.rel (%p549) target = $region88
        $region87: #{tpu_custom_call.1} parent=55 // pred_region
          %552 = dma.done %s545, 256
        $region88: #{tpu_custom_call.1} parent=55 // pred_fallthru
          _
        %s553 = sand.u32 %s46, 1
        %s554 = scalar_lea.sflag [#allocation3], %s553
        %s555 = sand.u32 %s46, 1
        %s556 = smul.addr %s555, 16
        %s557 = scalar_lea.vmem [#allocation2], %s556
        %p558 = pneg %p59
        %p559 = pneg %p56
        %s560 = sand.u32 %s38, 1
        %s561 = scalar_lea.sflag [#allocation6], %s560
        %s562 = sand.u32 %s72, 1
        %s563 = smul.addr %s562, 16
        %s564 = scalar_lea.vmem [#allocation5], %s563
        %p565 = pneg %p85
        %p566 = pneg %p82
        %s567 = sand.u32 %s38, 1
        %s568 = scalar_lea.sflag [#allocation6], %s567
        %s569 = sand.u32 %s98, 1
        %s570 = smul.addr %s569, 16
        %s571 = scalar_lea.vmem [#allocation7], %s570
        %p572 = pneg %p111
        %p573 = pneg %p108
        %s574 = sand.u32 %s38, 1
        %s575 = scalar_lea.sflag [#allocation9], %s574
        %s576 = sand.u32 %s124, 1
        %s577 = scalar_lea.vmem [#allocation8], %s576
        %p578 = pneg %p137
        %p579 = pneg %p134
        %s580 = sand.u32 %s38, 1
        %s581 = scalar_lea.sflag [#allocation9], %s580
        %s582 = sand.u32 %s150, 1
        %s583 = smul.addr %s582, 16
        %s584 = scalar_lea.vmem [#allocation10], %s583
        %p585 = pneg %p163
        %p586 = pneg %p160
        %s587 = sand.u32 %s38, 1
        %s588 = scalar_lea.sflag [#allocation12], %s587
        %s589 = sand.u32 %s176, 1
        %s590 = scalar_lea.vmem [#allocation11], %s589
        %p591 = pneg %p189
        %p592 = pneg %p186
        %s593 = sand.u32 %s38, 1
        %s594 = scalar_lea.sflag [#allocation12], %s593
        %s595 = sand.u32 %s202, 1
        %s596 = smul.addr %s595, 8
        %s597 = scalar_lea.vmem [#allocation13], %s596
        %p598 = pneg %p215
        %p599 = pneg %p212
        %p600 = scmp.lt.s32.totalorder %s38, 2
        %s601 = scalar_select %p600, %s38, 2
        %s602 = smul.addr %s601, 8
        %s603 = scalar_lea.vmem %s7, %s602
        %p604 = pneg %p241
        %p605 = pneg %p238
        %s606 = sand.u32 %s254, 1
        %s607 = scalar_lea.sflag [#allocation15], %s606
        %s608 = sand.u32 %s254, 1
        %s609 = smul.addr %s608, 16
        %s610 = scalar_lea.vmem [#allocation14], %s609
        %p611 = pneg %p267
        %p612 = pneg %p264
        %p613 = pneg %p293
        %p614 = pneg %p290
        %s615 = sand.u32 %s280, 1
        %s616 = scalar_lea.sflag [#allocation4], %s615
        %s617 = sand.u32 %s280, 1
        %s618 = smul.addr %s617, 16
        %s619 = scalar_lea.vmem [#allocation16], %s618
        %p620 = scmp.lt.s32.totalorder %s38, 2
        %s621 = scalar_select %p620, %s38, 2
        %s622 = smul.addr %s621, 8
        %s623 = scalar_lea.vmem %s7, %s622
        %v625 = vld [vmem:[%s487] sm:$0xff]
        %v626 = vld [vmem:[%s487 + $0x8] sm:$0xf]
        %v627 = vpack.c.bf16 %v626, %v625
        %v628 = vld [vmem:[%s505] sm:$0xff]
        %v629 = vld [vmem:[%s505 + $0x8] sm:$0xff]
        %v630 = vpack.c.bf16 %v629, %v628
        %v631 = vld [vmem:[%s513] sm:$0x1]
        %v633 = vlaneseq
        %v634 = vshrl.u32 %v633, 7
        %v635 = vsub.s32 0, %v634
        %v636 = vrot.slane %v631, %v635
        %vm638 = vcmask 130048
        %v640 = vsel %vm638, %v627, 0
        %642 = vmatprep.subr.bf16.mxu0 0
        %643 = vmatpush1.bf16.msra.mxu0 %v630
        %644 = vmatprep.subr.bf16.mxu0 0
        %645 = vmatpush1.bf16.msra.mxu0 0
        %646 = vmatprep.subr.bf16.mxu0 0
        %647 = vmatpush1.bf16.msra.mxu0 0
        %648 = vmatprep.subr.bf16.mxu0 0
        %649 = vmatpush1.bf16.msra.mxu0 0
        %650 = vmatprep.subr.bf16.mxu0 0
        %651 = vmatpush1.bf16.msra.mxu0 0
        %652 = vmatprep.subr.bf16.mxu0 0
        %653 = vmatpush1.bf16.msra.mxu0 0
        %654 = vmatprep.subr.bf16.mxu0 0
        %655 = vmatpush1.bf16.msra.mxu0 0
        %656 = vmatprep.subr.bf16.mxu0 0
        %657 = vmatpush1.bf16.msra.mxu0 0
        %658 = vmatprep.subr.bf16.mxu0 0
        %659 = vmatpush1.bf16.msra.mxu0 0
        %660 = vmatprep.subr.bf16.mxu0 0
        %661 = vmatpush1.bf16.msra.mxu0 0
        %662 = vmatprep.subr.bf16.mxu0 0
        %663 = vmatpush1.bf16.msra.mxu0 0
        %664 = vmatprep.subr.bf16.mxu0 0
        %665 = vmatpush1.bf16.msra.mxu0 0
        %666 = vmatprep.subr.bf16.mxu0 0
        %667 = vmatpush1.bf16.msra.mxu0 0
        %668 = vmatprep.subr.bf16.mxu0 0
        %669 = vmatpush1.bf16.msra.mxu0 0
        %670 = vmatprep.subr.bf16.mxu0 0
        %671 = vmatpush1.bf16.msra.mxu0 0
        %672 = vmatprep.subr.bf16.mxu0 0
        %673 = vmatpush1.bf16.msra.mxu0 0
        %674 = vmatprep.mubr.bf16.mxu0 0
        %675 = vmatmul.mubr.bf16.gmra.mrb[0].mxu0 %v640
        %v676 = vpop.f32.mrb[0].mxu0
        %v677 = vadd.f32 %v636, %v676
        %v678 = vpop.f32.mrb[0].mxu0
        %v679 = vpop.f32.mrb[0].mxu0
        %v680 = vadd.f32 %v636, %v679
        %v681 = vpop.f32.mrb[0].mxu0
        %682 = vdwg.mxu0
        %v683 = vld [vmem:[%s496] sm:$0xff]
        %v684 = vld [vmem:[%s496 + $0x8] sm:$0xf]
        %v685 = vpack.c.bf16 %v684, %v683
        %v686 = vld [vmem:[%s522] sm:$0xff]
        %v687 = vld [vmem:[%s522 + $0x8] sm:$0xff]
        %v688 = vpack.c.bf16 %v687, %v686
        %v689 = vld [vmem:[%s530] sm:$0x1]
        %v691 = vlaneseq
        %v692 = vshrl.u32 %v691, 7
        %v693 = vsub.s32 0, %v692
        %v694 = vrot.slane %v689, %v693
        %v697 = vsel %vm638, %v685, 0
        %699 = vmatprep.subr.bf16.mxu0 0
        %700 = vmatpush1.bf16.msra.mxu0 %v688
        %701 = vmatprep.subr.bf16.mxu0 0
        %702 = vmatpush1.bf16.msra.mxu0 0
        %703 = vmatprep.subr.bf16.mxu0 0
        %704 = vmatpush1.bf16.msra.mxu0 0
        %705 = vmatprep.subr.bf16.mxu0 0
        %706 = vmatpush1.bf16.msra.mxu0 0
        %707 = vmatprep.subr.bf16.mxu0 0
        %708 = vmatpush1.bf16.msra.mxu0 0
        %709 = vmatprep.subr.bf16.mxu0 0
        %710 = vmatpush1.bf16.msra.mxu0 0
        %711 = vmatprep.subr.bf16.mxu0 0
        %712 = vmatpush1.bf16.msra.mxu0 0
        %713 = vmatprep.subr.bf16.mxu0 0
        %714 = vmatpush1.bf16.msra.mxu0 0
        %715 = vmatprep.subr.bf16.mxu0 0
        %716 = vmatpush1.bf16.msra.mxu0 0
        %717 = vmatprep.subr.bf16.mxu0 0
        %718 = vmatpush1.bf16.msra.mxu0 0
        %719 = vmatprep.subr.bf16.mxu0 0
        %720 = vmatpush1.bf16.msra.mxu0 0
        %721 = vmatprep.subr.bf16.mxu0 0
        %722 = vmatpush1.bf16.msra.mxu0 0
        %723 = vmatprep.subr.bf16.mxu0 0
        %724 = vmatpush1.bf16.msra.mxu0 0
        %725 = vmatprep.subr.bf16.mxu0 0
        %726 = vmatpush1.bf16.msra.mxu0 0
        %727 = vmatprep.subr.bf16.mxu0 0
        %728 = vmatpush1.bf16.msra.mxu0 0
        %729 = vmatprep.subr.bf16.mxu0 0
        %730 = vmatpush1.bf16.msra.mxu0 0
        %731 = vmatprep.mubr.bf16.mxu0 0
        %732 = vmatmul.mubr.bf16.gmra.mrb[0].mxu0 %v697
        %v733 = vpop.f32.mrb[0].mxu0
        %v734 = vadd.f32 %v694, %v733
        %v735 = vpop.f32.mrb[0].mxu0
        %v736 = vpop.f32.mrb[0].mxu0
        %v737 = vadd.f32 %v694, %v736
        %v738 = vpop.f32.mrb[0].mxu0
        %739 = vdwg.mxu0
        %v740 = vld [vmem:[%s548] sm:$0xff]
        %v741 = vld [vmem:[%s548 + $0x8] sm:$0xf]
        %v742 = vpack.c.bf16 %v680, %v677
        %v743 = vld [vmem:[%s539] sm:$0xff]
        %v744 = vpack.c.bf16 %v743, %v743
        %vm745 = vcmask 261120
        %v747 = vsel %vm745, %v744, 0
        %v750 = vsel %vm745, %v742, 0
        %752 = vmatprep.subr.bf16.mxu0 0
        %753 = vmatpush1.bf16.xpose.msra.mxu0 %v750
        %754 = vmatprep.subr.bf16.mxu0 0
        %755 = vmatpush1.bf16.xpose.msra.mxu0 0
        %756 = vmatprep.subr.bf16.mxu0 0
        %757 = vmatpush1.bf16.xpose.msra.mxu0 0
        %758 = vmatprep.subr.bf16.mxu0 0
        %759 = vmatpush1.bf16.xpose.msra.mxu0 0
        %760 = vmatprep.subr.bf16.mxu0 0
        %761 = vmatpush1.bf16.xpose.msra.mxu0 0
        %762 = vmatprep.subr.bf16.mxu0 0
        %763 = vmatpush1.bf16.xpose.msra.mxu0 0
        %764 = vmatprep.subr.bf16.mxu0 0
        %765 = vmatpush1.bf16.xpose.msra.mxu0 0
        %766 = vmatprep.subr.bf16.mxu0 0
        %767 = vmatpush1.bf16.xpose.msra.mxu0 0
        %768 = vmatprep.subr.bf16.mxu0 0
        %769 = vmatpush1.bf16.xpose.msra.mxu0 0
        %770 = vmatprep.subr.bf16.mxu0 0
        %771 = vmatpush1.bf16.xpose.msra.mxu0 0
        %772 = vmatprep.subr.bf16.mxu0 0
        %773 = vmatpush1.bf16.xpose.msra.mxu0 0
        %774 = vmatprep.subr.bf16.mxu0 0
        %775 = vmatpush1.bf16.xpose.msra.mxu0 0
        %776 = vmatprep.subr.bf16.mxu0 0
        %777 = vmatpush1.bf16.xpose.msra.mxu0 0
        %778 = vmatprep.subr.bf16.mxu0 0
        %779 = vmatpush1.bf16.xpose.msra.mxu0 0
        %780 = vmatprep.subr.bf16.mxu0 0
        %781 = vmatpush1.bf16.xpose.msra.mxu0 0
        %782 = vmatprep.subr.bf16.mxu0 0
        %783 = vmatpush1.bf16.xpose.msra.mxu0 0
        %784 = vmatprep.mubr.bf16.mxu0 0
        %785 = vmatmul.mubr.bf16.gmra.mrb[0].mxu0 %v747
        %v786 = vpop.f32.mrb[0].mxu0
        %v787 = vadd.f32 0.0, %v786
        %v788 = vpop.f32.mrb[0].mxu0
        %v789 = vpop.f32.mrb[0].mxu0
        %v790 = vpop.f32.mrb[0].mxu0
        %791 = vdwg.mxu0
        %v792 = vld [vmem:[%s623] sm:$0xff]
        %v793 = vpack.c.bf16 %v792, %v792
        %v794 = vpack.c.bf16 %v737, %v734
        %v796 = vsel %vm745, %v793, 0
        %v799 = vsel %vm745, %v794, 0
        %801 = vmatprep.subr.bf16.mxu0 0
        %802 = vmatpush1.bf16.xpose.msra.mxu0 %v799
        %803 = vmatprep.subr.bf16.mxu0 0
        %804 = vmatpush1.bf16.xpose.msra.mxu0 0
        %805 = vmatprep.subr.bf16.mxu0 0
        %806 = vmatpush1.bf16.xpose.msra.mxu0 0
        %807 = vmatprep.subr.bf16.mxu0 0
        %808 = vmatpush1.bf16.xpose.msra.mxu0 0
        %809 = vmatprep.subr.bf16.mxu0 0
        %810 = vmatpush1.bf16.xpose.msra.mxu0 0
        %811 = vmatprep.subr.bf16.mxu0 0
        %812 = vmatpush1.bf16.xpose.msra.mxu0 0
        %813 = vmatprep.subr.bf16.mxu0 0
        %814 = vmatpush1.bf16.xpose.msra.mxu0 0
        %815 = vmatprep.subr.bf16.mxu0 0
        %816 = vmatpush1.bf16.xpose.msra.mxu0 0
        %817 = vmatprep.subr.bf16.mxu0 0
        %818 = vmatpush1.bf16.xpose.msra.mxu0 0
        %819 = vmatprep.subr.bf16.mxu0 0
        %820 = vmatpush1.bf16.xpose.msra.mxu0 0
        %821 = vmatprep.subr.bf16.mxu0 0
        %822 = vmatpush1.bf16.xpose.msra.mxu0 0
        %823 = vmatprep.subr.bf16.mxu0 0
        %824 = vmatpush1.bf16.xpose.msra.mxu0 0
        %825 = vmatprep.subr.bf16.mxu0 0
        %826 = vmatpush1.bf16.xpose.msra.mxu0 0
        %827 = vmatprep.subr.bf16.mxu0 0
        %828 = vmatpush1.bf16.xpose.msra.mxu0 0
        %829 = vmatprep.subr.bf16.mxu0 0
        %830 = vmatpush1.bf16.xpose.msra.mxu0 0
        %831 = vmatprep.subr.bf16.mxu0 0
        %832 = vmatpush1.bf16.xpose.msra.mxu0 0
        %833 = vmatprep.mubr.bf16.mxu0 0
        %834 = vmatmul.mubr.bf16.gmra.mrb[0].mxu0 %v796
        %v835 = vpop.f32.mrb[0].mxu0
        %v836 = vadd.f32 0.0, %v835
        %v837 = vpop.f32.mrb[0].mxu0
        %v838 = vpop.f32.mrb[0].mxu0
        %v839 = vpop.f32.mrb[0].mxu0
        %840 = vdwg.mxu0
        %v841 = vlaneseq
        %v842 = vshrl.u32 %v841, 7
        %v843 = vsub.s32 0, %v842
        %v844 = vrot.slane %v836, %v843
        %846 = vbcast.lane.b32.xlu0 %v844, 256
        %v847 = vpop.permute.xlu0 %846
        %s849 = sor.u32 256, 8
        %850 = vbcast.lane.b32.xlu0 %v844, %s849
        %v851 = vpop.permute.xlu0 %850
        %v852 = vlaneseq
        %v853 = vshrl.u32 %v852, 7
        %v854 = vsub.s32 1, %v853
        %v855 = vrot.slane %v836, %v854
        %857 = vbcast.lane.b32.xlu0 %v855, 256
        %v858 = vpop.permute.xlu0 %857
        %s860 = sor.u32 256, 8
        %861 = vbcast.lane.b32.xlu0 %v855, %s860
        %v862 = vpop.permute.xlu0 %861
        %v863 = vlaneseq
        %v864 = vshrl.u32 %v863, 7
        %v865 = vsub.s32 2, %v864
        %v866 = vrot.slane %v836, %v865
        %868 = vbcast.lane.b32.xlu0 %v866, 256
        %v869 = vpop.permute.xlu0 %868
        %s871 = sor.u32 256, 8
        %872 = vbcast.lane.b32.xlu0 %v866, %s871
        %v873 = vpop.permute.xlu0 %872
        %v874 = vlaneseq
        %v875 = vshrl.u32 %v874, 7
        %v876 = vsub.s32 3, %v875
        %v877 = vrot.slane %v836, %v876
        %879 = vbcast.lane.b32.xlu0 %v877, 256
        %v880 = vpop.permute.xlu0 %879
        %s882 = sor.u32 256, 8
        %883 = vbcast.lane.b32.xlu0 %v877, %s882
        %v884 = vpop.permute.xlu0 %883
        %v885 = vlaneseq
        %v886 = vshrl.u32 %v885, 7
        %v887 = vsub.s32 4, %v886
        %v888 = vrot.slane %v836, %v887
        %890 = vbcast.lane.b32.xlu0 %v888, 256
        %v891 = vpop.permute.xlu0 %890
        %s893 = sor.u32 256, 8
        %894 = vbcast.lane.b32.xlu0 %v888, %s893
        %v895 = vpop.permute.xlu0 %894
        %v896 = vlaneseq
        %v897 = vshrl.u32 %v896, 7
        %v898 = vsub.s32 5, %v897
        %v899 = vrot.slane %v836, %v898
        %901 = vbcast.lane.b32.xlu0 %v899, 256
        %v902 = vpop.permute.xlu0 %901
        %s904 = sor.u32 256, 8
        %905 = vbcast.lane.b32.xlu0 %v899, %s904
        %v906 = vpop.permute.xlu0 %905
        %v907 = vlaneseq
        %v908 = vshrl.u32 %v907, 7
        %v909 = vsub.s32 6, %v908
        %v910 = vrot.slane %v836, %v909
        %912 = vbcast.lane.b32.xlu0 %v910, 256
        %v913 = vpop.permute.xlu0 %912
        %s915 = sor.u32 256, 8
        %916 = vbcast.lane.b32.xlu0 %v910, %s915
        %v917 = vpop.permute.xlu0 %916
        %v918 = vlaneseq
        %v919 = vshrl.u32 %v918, 7
        %v920 = vsub.s32 7, %v919
        %v921 = vrot.slane %v836, %v920
        %923 = vbcast.lane.b32.xlu0 %v921, 256
        %v924 = vpop.permute.xlu0 %923
        %s926 = sor.u32 256, 8
        %927 = vbcast.lane.b32.xlu0 %v921, %s926
        %v928 = vpop.permute.xlu0 %927
        %v930 = vcombine.high %v787, %v787
        %v932 = vunpack.c.l.s4 1966171168
        %v933 = vunpack.c.0.s8 %v932
        %v934 = vlaneseq
        %v935 = vshrl.u32 %v934, 7
        %v936 = vsub.s32 %v933, %v935
        %v937 = vrot.slane %v787, %v936
        %v939 = vunpack.c.l.s4 1966171168
        %v940 = vunpack.c.0.s8 %v939
        %v941 = vlaneseq
        %v942 = vshrl.u32 %v941, 7
        %v943 = vsub.s32 %v940, %v942
        %v944 = vrot.slane %v930, %v943
        %v945 = vcombine.high %v937, %v937
        %v946 = vcombine.high %v944, %v944
        %v948 = vunpack.c.l.s4 1966171168
        %v949 = vunpack.c.0.s8 %v948
        %v950 = vlaneseq
        %v951 = vshrl.u32 %v950, 7
        %v952 = vsub.s32 %v949, %v951
        %v953 = vrot.slane %v937, %v952
        %v955 = vunpack.c.l.s4 1966171168
        %v956 = vunpack.c.0.s8 %v955
        %v957 = vlaneseq
        %v958 = vshrl.u32 %v957, 7
        %v959 = vsub.s32 %v956, %v958
        %v960 = vrot.slane %v944, %v959
        %v962 = vunpack.c.l.s4 1966171168
        %v963 = vunpack.c.0.s8 %v962
        %v964 = vlaneseq
        %v965 = vshrl.u32 %v964, 7
        %v966 = vsub.s32 %v963, %v965
        %v967 = vrot.slane %v945, %v966
        %v969 = vunpack.c.l.s4 1966171168
        %v970 = vunpack.c.0.s8 %v969
        %v971 = vlaneseq
        %v972 = vshrl.u32 %v971, 7
        %v973 = vsub.s32 %v970, %v972
        %v974 = vrot.slane %v946, %v973
        %v975 = vcombine.high %v953, %v953
        %v976 = vcombine.high %v960, %v960
        %v977 = vcombine.high %v967, %v967
        %v978 = vcombine.high %v974, %v974
        %v979 = vlaneseq
        %v980 = vshrl.u32 %v979, 7
        %v981 = vsub.s32 0, %v980
        %v982 = vrot.slane %v953, %v981
        %v983 = vlaneseq
        %v984 = vshrl.u32 %v983, 7
        %v985 = vsub.s32 0, %v984
        %v986 = vrot.slane %v967, %v985
        %v987 = vlaneseq
        %v988 = vshrl.u32 %v987, 7
        %v989 = vsub.s32 0, %v988
        %v990 = vrot.slane %v975, %v989
        %v991 = vlaneseq
        %v992 = vshrl.u32 %v991, 7
        %v993 = vsub.s32 0, %v992
        %v994 = vrot.slane %v977, %v993
        %v995 = vlaneseq
        %v996 = vshrl.u32 %v995, 7
        %v997 = vsub.s32 0, %v996
        %v998 = vrot.slane %v960, %v997
        %v999 = vlaneseq
        %v1000 = vshrl.u32 %v999, 7
        %v1001 = vsub.s32 0, %v1000
        %v1002 = vrot.slane %v974, %v1001
        %v1003 = vlaneseq
        %v1004 = vshrl.u32 %v1003, 7
        %v1005 = vsub.s32 0, %v1004
        %v1006 = vrot.slane %v976, %v1005
        %v1007 = vlaneseq
        %v1008 = vshrl.u32 %v1007, 7
        %v1009 = vsub.s32 0, %v1008
        %v1010 = vrot.slane %v978, %v1009
        %v1019 = vadd.f32 %v847, %v982
        %v1020 = vadd.f32 %v851, %v982
        %v1021 = vadd.f32 %v858, %v986
        %v1022 = vadd.f32 %v862, %v986
        %v1023 = vadd.f32 %v869, %v990
        %v1024 = vadd.f32 %v873, %v990
        %v1025 = vadd.f32 %v880, %v994
        %v1026 = vadd.f32 %v884, %v994
        %v1027 = vadd.f32 %v891, %v998
        %v1028 = vadd.f32 %v895, %v998
        %v1029 = vadd.f32 %v902, %v1002
        %v1030 = vadd.f32 %v906, %v1002
        %v1031 = vadd.f32 %v913, %v1006
        %v1032 = vadd.f32 %v917, %v1006
        %v1033 = vadd.f32 %v924, %v1010
        %v1034 = vadd.f32 %v928, %v1010
        %vm1035 = vcmp.ge.f32.partialorder %v1019, 0.0
        %vm1036 = vcmp.ge.f32.partialorder %v1020, 0.0
        %vm1037 = vcmp.ge.f32.partialorder %v1021, 0.0
        %vm1038 = vcmp.ge.f32.partialorder %v1022, 0.0
        %vm1039 = vcmp.ge.f32.partialorder %v1023, 0.0
        %vm1040 = vcmp.ge.f32.partialorder %v1024, 0.0
        %vm1041 = vcmp.ge.f32.partialorder %v1025, 0.0
        %vm1042 = vcmp.ge.f32.partialorder %v1026, 0.0
        %vm1043 = vcmp.ge.f32.partialorder %v1027, 0.0
        %vm1044 = vcmp.ge.f32.partialorder %v1028, 0.0
        %vm1045 = vcmp.ge.f32.partialorder %v1029, 0.0
        %vm1046 = vcmp.ge.f32.partialorder %v1030, 0.0
        %vm1047 = vcmp.ge.f32.partialorder %v1031, 0.0
        %vm1048 = vcmp.ge.f32.partialorder %v1032, 0.0
        %vm1049 = vcmp.ge.f32.partialorder %v1033, 0.0
        %vm1050 = vcmp.ge.f32.partialorder %v1034, 0.0
        %v1051 = vmul.f32 %v1019, 0.2
        %v1052 = vmul.f32 %v1020, 0.2
        %v1053 = vmul.f32 %v1021, 0.2
        %v1054 = vmul.f32 %v1022, 0.2
        %v1055 = vmul.f32 %v1023, 0.2
        %v1056 = vmul.f32 %v1024, 0.2
        %v1057 = vmul.f32 %v1025, 0.2
        %v1058 = vmul.f32 %v1026, 0.2
        %v1059 = vmul.f32 %v1027, 0.2
        %v1060 = vmul.f32 %v1028, 0.2
        %v1061 = vmul.f32 %v1029, 0.2
        %v1062 = vmul.f32 %v1030, 0.2
        %v1063 = vmul.f32 %v1031, 0.2
        %v1064 = vmul.f32 %v1032, 0.2
        %v1065 = vmul.f32 %v1033, 0.2
        %v1066 = vmul.f32 %v1034, 0.2
        %v1067 = vsel %vm1035, %v1019, %v1051
        %v1068 = vsel %vm1036, %v1020, %v1052
        %v1069 = vsel %vm1037, %v1021, %v1053
        %v1070 = vsel %vm1038, %v1022, %v1054
        %v1071 = vsel %vm1039, %v1023, %v1055
        %v1072 = vsel %vm1040, %v1024, %v1056
        %v1073 = vsel %vm1041, %v1025, %v1057
        %v1074 = vsel %vm1042, %v1026, %v1058
        %v1075 = vsel %vm1043, %v1027, %v1059
        %v1076 = vsel %vm1044, %v1028, %v1060
        %v1077 = vsel %vm1045, %v1029, %v1061
        %v1078 = vsel %vm1046, %v1030, %v1062
        %v1079 = vsel %vm1047, %v1031, %v1063
        %v1080 = vsel %vm1048, %v1032, %v1064
        %v1081 = vsel %vm1049, %v1033, %v1065
        %v1082 = vsel %vm1050, %v1034, %v1066
        %vm1083 = vcmp.gt.f32.partialorder %v740, 0.0
        %vm1084 = vcmp.gt.f32.partialorder %v741, 0.0
        %v1085 = vsel %vm1083, 1, 0
        %v1086 = vsel %vm1084, 1, 0
        %vm1087 = vcmp.eq.s32.totalorder %v1085, 1
        %vm1088 = vcmp.eq.s32.totalorder %v1086, 1
        %v1089 = vsel %vm1087, %v1067, -1e+30
        %v1090 = vsel %vm1088, %v1068, -1e+30
        %v1091 = vsel %vm1087, %v1069, -1e+30
        %v1092 = vsel %vm1088, %v1070, -1e+30
        %v1093 = vsel %vm1087, %v1071, -1e+30
        %v1094 = vsel %vm1088, %v1072, -1e+30
        %v1095 = vsel %vm1087, %v1073, -1e+30
        %v1096 = vsel %vm1088, %v1074, -1e+30
        %v1097 = vsel %vm1087, %v1075, -1e+30
        %v1098 = vsel %vm1088, %v1076, -1e+30
        %v1099 = vsel %vm1087, %v1077, -1e+30
        %v1100 = vsel %vm1088, %v1078, -1e+30
        %v1101 = vsel %vm1087, %v1079, -1e+30
        %v1102 = vsel %vm1088, %v1080, -1e+30
        %v1103 = vsel %vm1087, %v1081, -1e+30
        %v1104 = vsel %vm1088, %v1082, -1e+30
        %vm1105 = vcmask 97280
        %v1106 = vsel %vm1105, %v1089, -inf
        %1107 = vmax.xlane.f32.xlu0 %v1106
        %v1108 = vpop.xlane.xlu0 %1107
        %vm1109 = vcmask 93184
        %v1110 = vsel %vm1109, %v1090, -inf
        %1111 = vmax.xlane.f32.xlu0 %v1110
        %v1112 = vpop.xlane.xlu0 %1111
        %v1113 = vsel %vm1105, %v1091, -inf
        %1114 = vmax.xlane.f32.xlu0 %v1113
        %v1115 = vpop.xlane.xlu0 %1114
        %v1116 = vsel %vm1109, %v1092, -inf
        %1117 = vmax.xlane.f32.xlu0 %v1116
        %v1118 = vpop.xlane.xlu0 %1117
        %v1119 = vsel %vm1105, %v1093, -inf
        %1120 = vmax.xlane.f32.xlu0 %v1119
        %v1121 = vpop.xlane.xlu0 %1120
        %v1122 = vsel %vm1109, %v1094, -inf
        %1123 = vmax.xlane.f32.xlu0 %v1122
        %v1124 = vpop.xlane.xlu0 %1123
        %v1125 = vsel %vm1105, %v1095, -inf
        %1126 = vmax.xlane.f32.xlu0 %v1125
        %v1127 = vpop.xlane.xlu0 %1126
        %v1128 = vsel %vm1109, %v1096, -inf
        %1129 = vmax.xlane.f32.xlu0 %v1128
        %v1130 = vpop.xlane.xlu0 %1129
        %v1131 = vsel %vm1105, %v1097, -inf
        %1132 = vmax.xlane.f32.xlu0 %v1131
        %v1133 = vpop.xlane.xlu0 %1132
        %v1134 = vsel %vm1109, %v1098, -inf
        %1135 = vmax.xlane.f32.xlu0 %v1134
        %v1136 = vpop.xlane.xlu0 %1135
        %v1137 = vsel %vm1105, %v1099, -inf
        %1138 = vmax.xlane.f32.xlu0 %v1137
        %v1139 = vpop.xlane.xlu0 %1138
        %v1140 = vsel %vm1109, %v1100, -inf
        %1141 = vmax.xlane.f32.xlu0 %v1140
        %v1142 = vpop.xlane.xlu0 %1141
        %v1143 = vsel %vm1105, %v1101, -inf
        %1144 = vmax.xlane.f32.xlu0 %v1143
        %v1145 = vpop.xlane.xlu0 %1144
        %v1146 = vsel %vm1109, %v1102, -inf
        %1147 = vmax.xlane.f32.xlu0 %v1146
        %v1148 = vpop.xlane.xlu0 %1147
        %v1149 = vsel %vm1105, %v1103, -inf
        %1150 = vmax.xlane.f32.xlu0 %v1149
        %v1151 = vpop.xlane.xlu0 %1150
        %v1152 = vsel %vm1109, %v1104, -inf
        %1153 = vmax.xlane.f32.xlu0 %v1152
        %v1154 = vpop.xlane.xlu0 %1153
        %v1155 = vsub.f32 %v1089, %v1108
        %v1156 = vsub.f32 %v1090, %v1112
        %v1157 = vsub.f32 %v1091, %v1115
        %v1158 = vsub.f32 %v1092, %v1118
        %v1159 = vsub.f32 %v1093, %v1121
        %v1160 = vsub.f32 %v1094, %v1124
        %v1161 = vsub.f32 %v1095, %v1127
        %v1162 = vsub.f32 %v1096, %v1130
        %v1163 = vsub.f32 %v1097, %v1133
        %v1164 = vsub.f32 %v1098, %v1136
        %v1165 = vsub.f32 %v1099, %v1139
        %v1166 = vsub.f32 %v1100, %v1142
        %v1167 = vsub.f32 %v1101, %v1145
        %v1168 = vsub.f32 %v1102, %v1148
        %v1169 = vsub.f32 %v1103, %v1151
        %v1170 = vsub.f32 %v1104, %v1154
        %v1171 = vmul.f32 %v1155, 1.442695
        %v1172 = vpow.pop %v1171
        %v1173 = vmul.f32 %v1156, 1.442695
        %v1174 = vpow.pop %v1173
        %v1175 = vmul.f32 %v1157, 1.442695
        %v1176 = vpow.pop %v1175
        %v1177 = vmul.f32 %v1158, 1.442695
        %v1178 = vpow.pop %v1177
        %v1179 = vmul.f32 %v1159, 1.442695
        %v1180 = vpow.pop %v1179
        %v1181 = vmul.f32 %v1160, 1.442695
        %v1182 = vpow.pop %v1181
        %v1183 = vmul.f32 %v1161, 1.442695
        %v1184 = vpow.pop %v1183
        %v1185 = vmul.f32 %v1162, 1.442695
        %v1186 = vpow.pop %v1185
        %v1187 = vmul.f32 %v1163, 1.442695
        %v1188 = vpow.pop %v1187
        %v1189 = vmul.f32 %v1164, 1.442695
        %v1190 = vpow.pop %v1189
        %v1191 = vmul.f32 %v1165, 1.442695
        %v1192 = vpow.pop %v1191
        %v1193 = vmul.f32 %v1166, 1.442695
        %v1194 = vpow.pop %v1193
        %v1195 = vmul.f32 %v1167, 1.442695
        %v1196 = vpow.pop %v1195
        %v1197 = vmul.f32 %v1168, 1.442695
        %v1198 = vpow.pop %v1197
        %v1199 = vmul.f32 %v1169, 1.442695
        %v1200 = vpow.pop %v1199
        %v1201 = vmul.f32 %v1170, 1.442695
        %v1202 = vpow.pop %v1201
        %v1203 = vmul.f32 %v1172, %v740
        %v1204 = vmul.f32 %v1174, %v741
        %v1205 = vmul.f32 %v1176, %v740
        %v1206 = vmul.f32 %v1178, %v741
        %v1207 = vmul.f32 %v1180, %v740
        %v1208 = vmul.f32 %v1182, %v741
        %v1209 = vmul.f32 %v1184, %v740
        %v1210 = vmul.f32 %v1186, %v741
        %v1211 = vmul.f32 %v1188, %v740
        %v1212 = vmul.f32 %v1190, %v741
        %v1213 = vmul.f32 %v1192, %v740
        %v1214 = vmul.f32 %v1194, %v741
        %v1215 = vmul.f32 %v1196, %v740
        %v1216 = vmul.f32 %v1198, %v741
        %v1217 = vmul.f32 %v1200, %v740
        %v1218 = vmul.f32 %v1202, %v741
        %v1219 = vsel %vm1105, %v1203, 0.0
        %1220 = vadd.xlane.f32.xlu0 %v1219
        %v1221 = vpop.xlane.xlu0 %1220
        %v1222 = vsel %vm1109, %v1204, 0.0
        %1223 = vadd.xlane.f32.xlu0 %v1222
        %v1224 = vpop.xlane.xlu0 %1223
        %v1225 = vsel %vm1105, %v1205, 0.0
        %1226 = vadd.xlane.f32.xlu0 %v1225
        %v1227 = vpop.xlane.xlu0 %1226
        %v1228 = vsel %vm1109, %v1206, 0.0
        %1229 = vadd.xlane.f32.xlu0 %v1228
        %v1230 = vpop.xlane.xlu0 %1229
        %v1231 = vsel %vm1105, %v1207, 0.0
        %1232 = vadd.xlane.f32.xlu0 %v1231
        %v1233 = vpop.xlane.xlu0 %1232
        %v1234 = vsel %vm1109, %v1208, 0.0
        %1235 = vadd.xlane.f32.xlu0 %v1234
        %v1236 = vpop.xlane.xlu0 %1235
        %v1237 = vsel %vm1105, %v1209, 0.0
        %1238 = vadd.xlane.f32.xlu0 %v1237
        %v1239 = vpop.xlane.xlu0 %1238
        %v1240 = vsel %vm1109, %v1210, 0.0
        %1241 = vadd.xlane.f32.xlu0 %v1240
        %v1242 = vpop.xlane.xlu0 %1241
        %v1243 = vsel %vm1105, %v1211, 0.0
        %1244 = vadd.xlane.f32.xlu0 %v1243
        %v1245 = vpop.xlane.xlu0 %1244
        %v1246 = vsel %vm1109, %v1212, 0.0
        %1247 = vadd.xlane.f32.xlu0 %v1246
        %v1248 = vpop.xlane.xlu0 %1247
        %v1249 = vsel %vm1105, %v1213, 0.0
        %1250 = vadd.xlane.f32.xlu0 %v1249
        %v1251 = vpop.xlane.xlu0 %1250
        %v1252 = vsel %vm1109, %v1214, 0.0
        %1253 = vadd.xlane.f32.xlu0 %v1252
        %v1254 = vpop.xlane.xlu0 %1253
        %v1255 = vsel %vm1105, %v1215, 0.0
        %1256 = vadd.xlane.f32.xlu0 %v1255
        %v1257 = vpop.xlane.xlu0 %1256
        %v1258 = vsel %vm1109, %v1216, 0.0
        %1259 = vadd.xlane.f32.xlu0 %v1258
        %v1260 = vpop.xlane.xlu0 %1259
        %v1261 = vsel %vm1105, %v1217, 0.0
        %1262 = vadd.xlane.f32.xlu0 %v1261
        %v1263 = vpop.xlane.xlu0 %1262
        %v1264 = vsel %vm1109, %v1218, 0.0
        %1265 = vadd.xlane.f32.xlu0 %v1264
        %v1266 = vpop.xlane.xlu0 %1265
        %v1267 = vmax.f32 %v1221, 1e-30
        %v1268 = vmax.f32 %v1224, 1e-30
        %v1269 = vmax.f32 %v1227, 1e-30
        %v1270 = vmax.f32 %v1230, 1e-30
        %v1271 = vmax.f32 %v1233, 1e-30
        %v1272 = vmax.f32 %v1236, 1e-30
        %v1273 = vmax.f32 %v1239, 1e-30
        %v1274 = vmax.f32 %v1242, 1e-30
        %v1275 = vmax.f32 %v1245, 1e-30
        %v1276 = vmax.f32 %v1248, 1e-30
        %v1277 = vmax.f32 %v1251, 1e-30
        %v1278 = vmax.f32 %v1254, 1e-30
        %v1279 = vmax.f32 %v1257, 1e-30
        %v1280 = vmax.f32 %v1260, 1e-30
        %v1281 = vmax.f32 %v1263, 1e-30
        %v1282 = vmax.f32 %v1266, 1e-30
        %v1283 = vrcp.pop %v1267
        %v1284 = vrcp.pop %v1268
        %v1285 = vrcp.pop %v1269
        %v1286 = vrcp.pop %v1270
        %v1287 = vrcp.pop %v1271
        %v1288 = vrcp.pop %v1272
        %v1289 = vrcp.pop %v1273
        %v1290 = vrcp.pop %v1274
        %v1291 = vrcp.pop %v1275
        %v1292 = vrcp.pop %v1276
        %v1293 = vrcp.pop %v1277
        %v1294 = vrcp.pop %v1278
        %v1295 = vrcp.pop %v1279
        %v1296 = vrcp.pop %v1280
        %v1297 = vrcp.pop %v1281
        %v1298 = vrcp.pop %v1282
        %v1299 = vmul.f32 %v1203, %v1283
        %v1300 = vmul.f32 %v1204, %v1284
        %v1301 = vmul.f32 %v1205, %v1285
        %v1302 = vmul.f32 %v1206, %v1286
        %v1303 = vmul.f32 %v1207, %v1287
        %v1304 = vmul.f32 %v1208, %v1288
        %v1305 = vmul.f32 %v1209, %v1289
        %v1306 = vmul.f32 %v1210, %v1290
        %v1307 = vmul.f32 %v1211, %v1291
        %v1308 = vmul.f32 %v1212, %v1292
        %v1309 = vmul.f32 %v1213, %v1293
        %v1310 = vmul.f32 %v1214, %v1294
        %v1311 = vmul.f32 %v1215, %v1295
        %v1312 = vmul.f32 %v1216, %v1296
        %v1313 = vmul.f32 %v1217, %v1297
        %v1314 = vmul.f32 %v1218, %v1298
        %v1315 = vpack.c.bf16 %v1300, %v1299
        %v1316 = vpack.c.bf16 %v1302, %v1301
        %v1317 = vpack.c.bf16 %v1304, %v1303
        %v1318 = vpack.c.bf16 %v1306, %v1305
        %v1319 = vpack.c.bf16 %v1308, %v1307
        %v1320 = vpack.c.bf16 %v1310, %v1309
        %v1321 = vpack.c.bf16 %v1312, %v1311
        %v1322 = vpack.c.bf16 %v1314, %v1313
        %v1324 = vsel %vm1105, %v1315, 0
        %vm1326 = vcmask 1045504
        %v1327 = vsel %vm1326, %v742, 0
        %1329 = vmatprep.subr.bf16.mxu0 0
        %1330 = vmatpush1.bf16.msra.mxu0 %v1327
        %1331 = vmatprep.subr.bf16.mxu0 0
        %1332 = vmatpush1.bf16.msra.mxu0 0
        %1333 = vmatprep.subr.bf16.mxu0 0
        %1334 = vmatpush1.bf16.msra.mxu0 0
        %1335 = vmatprep.subr.bf16.mxu0 0
        %1336 = vmatpush1.bf16.msra.mxu0 0
        %1337 = vmatprep.subr.bf16.mxu0 0
        %1338 = vmatpush1.bf16.msra.mxu0 0
        %1339 = vmatprep.subr.bf16.mxu0 0
        %1340 = vmatpush1.bf16.msra.mxu0 0
        %1341 = vmatprep.subr.bf16.mxu0 0
        %1342 = vmatpush1.bf16.msra.mxu0 0
        %1343 = vmatprep.subr.bf16.mxu0 0
        %1344 = vmatpush1.bf16.msra.mxu0 0
        %1345 = vmatprep.subr.bf16.mxu0 0
        %1346 = vmatpush1.bf16.msra.mxu0 0
        %1347 = vmatprep.subr.bf16.mxu0 0
        %1348 = vmatpush1.bf16.msra.mxu0 0
        %1349 = vmatprep.subr.bf16.mxu0 0
        %1350 = vmatpush1.bf16.msra.mxu0 0
        %1351 = vmatprep.subr.bf16.mxu0 0
        %1352 = vmatpush1.bf16.msra.mxu0 0
        %1353 = vmatprep.subr.bf16.mxu0 0
        %1354 = vmatpush1.bf16.msra.mxu0 0
        %1355 = vmatprep.subr.bf16.mxu0 0
        %1356 = vmatpush1.bf16.msra.mxu0 0
        %1357 = vmatprep.subr.bf16.mxu0 0
        %1358 = vmatpush1.bf16.msra.mxu0 0
        %1359 = vmatprep.subr.bf16.mxu0 0
        %1360 = vmatpush1.bf16.msra.mxu0 0
        %1361 = vmatprep.mubr.bf16.mxu0 0
        %1362 = vmatmul.mubr.bf16.gmra.mrb[0].mxu0 %v1324
        %v1363 = vpop.f32.mrb[0].mxu0
        %v1364 = vadd.f32 0.0, %v1363
        %v1365 = vpop.f32.mrb[0].mxu0
        %v1366 = vpop.f32.mrb[0].mxu0
        %v1367 = vadd.f32 0.0, %v1366
        %v1368 = vpop.f32.mrb[0].mxu0
        %1369 = vdwg.mxu0
        %v1370 = vmax.f32 %v1364, 0.0
        %v1371 = vmax.f32 %v1367, 0.0
        %vm1372 = vcmask 31744
        %1373 = vst.msk [vmem:[%s619] sm:$0xff] %vm1372, %v1370
        %vm1374 = vcmask 27648
        %1375 = vst.msk [vmem:[%s619 + $0x8] sm:$0xf] %vm1374, %v1371
        %1377 = vrot.lane.b32.xlu0 %v742, 124
        %v1378 = vpop.permute.xlu0 %1377
        %v1380 = vsel %vm1105, %v1316, 0
        %v1383 = vsel %vm1326, %v1378, 0
        %1385 = vmatprep.subr.bf16.mxu0 0
        %1386 = vmatpush1.bf16.msra.mxu0 %v1383
        %1387 = vmatprep.subr.bf16.mxu0 0
        %1388 = vmatpush1.bf16.msra.mxu0 0
        %1389 = vmatprep.subr.bf16.mxu0 0
        %1390 = vmatpush1.bf16.msra.mxu0 0
        %1391 = vmatprep.subr.bf16.mxu0 0
        %1392 = vmatpush1.bf16.msra.mxu0 0
        %1393 = vmatprep.subr.bf16.mxu0 0
        %1394 = vmatpush1.bf16.msra.mxu0 0
        %1395 = vmatprep.subr.bf16.mxu0 0
        %1396 = vmatpush1.bf16.msra.mxu0 0
        %1397 = vmatprep.subr.bf16.mxu0 0
        %1398 = vmatpush1.bf16.msra.mxu0 0
        %1399 = vmatprep.subr.bf16.mxu0 0
        %1400 = vmatpush1.bf16.msra.mxu0 0
        %1401 = vmatprep.subr.bf16.mxu0 0
        %1402 = vmatpush1.bf16.msra.mxu0 0
        %1403 = vmatprep.subr.bf16.mxu0 0
        %1404 = vmatpush1.bf16.msra.mxu0 0
        %1405 = vmatprep.subr.bf16.mxu0 0
        %1406 = vmatpush1.bf16.msra.mxu0 0
        %1407 = vmatprep.subr.bf16.mxu0 0
        %1408 = vmatpush1.bf16.msra.mxu0 0
        %1409 = vmatprep.subr.bf16.mxu0 0
        %1410 = vmatpush1.bf16.msra.mxu0 0
        %1411 = vmatprep.subr.bf16.mxu0 0
        %1412 = vmatpush1.bf16.msra.mxu0 0
        %1413 = vmatprep.subr.bf16.mxu0 0
        %1414 = vmatpush1.bf16.msra.mxu0 0
        %1415 = vmatprep.subr.bf16.mxu0 0
        %1416 = vmatpush1.bf16.msra.mxu0 0
        %1417 = vmatprep.mubr.bf16.mxu0 0
        %1418 = vmatmul.mubr.bf16.gmra.mrb[0].mxu0 %v1380
        %v1419 = vpop.f32.mrb[0].mxu0
        %v1420 = vadd.f32 0.0, %v1419
        %v1421 = vpop.f32.mrb[0].mxu0
        %v1422 = vpop.f32.mrb[0].mxu0
        %v1423 = vadd.f32 0.0, %v1422
        %v1424 = vpop.f32.mrb[0].mxu0
        %1425 = vdwg.mxu0
        %v1426 = vmax.f32 %v1420, 0.0
        %v1427 = vmax.f32 %v1423, 0.0
        %1430 = vrot.lane.b32.xlu0 %v1426, 4
        %v1431 = vpop.permute.xlu0 %1430
        %1432 = vrot.lane.b32.xlu0 %v1427, 4
        %v1433 = vpop.permute.xlu0 %1432
        %vm1436 = vcmask 64544
        %1437 = vst.msk [vmem:[%s619] sm:$0xff] %vm1436, %v1431
        %vm1438 = vcmask 60448
        %1439 = vst.msk [vmem:[%s619 + $0x8] sm:$0xf] %vm1438, %v1433
        %1440 = vrot.lane.b32.xlu0 %v742, 120
        %v1441 = vpop.permute.xlu0 %1440
        %v1443 = vsel %vm1105, %v1317, 0
        %v1446 = vsel %vm1326, %v1441, 0
        %1448 = vmatprep.subr.bf16.mxu0 0
        %1449 = vmatpush1.bf16.msra.mxu0 %v1446
        %1450 = vmatprep.subr.bf16.mxu0 0
        %1451 = vmatpush1.bf16.msra.mxu0 0
        %1452 = vmatprep.subr.bf16.mxu0 0
        %1453 = vmatpush1.bf16.msra.mxu0 0
        %1454 = vmatprep.subr.bf16.mxu0 0
        %1455 = vmatpush1.bf16.msra.mxu0 0
        %1456 = vmatprep.subr.bf16.mxu0 0
        %1457 = vmatpush1.bf16.msra.mxu0 0
        %1458 = vmatprep.subr.bf16.mxu0 0
        %1459 = vmatpush1.bf16.msra.mxu0 0
        %1460 = vmatprep.subr.bf16.mxu0 0
        %1461 = vmatpush1.bf16.msra.mxu0 0
        %1462 = vmatprep.subr.bf16.mxu0 0
        %1463 = vmatpush1.bf16.msra.mxu0 0
        %1464 = vmatprep.subr.bf16.mxu0 0
        %1465 = vmatpush1.bf16.msra.mxu0 0
        %1466 = vmatprep.subr.bf16.mxu0 0
        %1467 = vmatpush1.bf16.msra.mxu0 0
        %1468 = vmatprep.subr.bf16.mxu0 0
        %1469 = vmatpush1.bf16.msra.mxu0 0
        %1470 = vmatprep.subr.bf16.mxu0 0
        %1471 = vmatpush1.bf16.msra.mxu0 0
        %1472 = vmatprep.subr.bf16.mxu0 0
        %1473 = vmatpush1.bf16.msra.mxu0 0
        %1474 = vmatprep.subr.bf16.mxu0 0
        %1475 = vmatpush1.bf16.msra.mxu0 0
        %1476 = vmatprep.subr.bf16.mxu0 0
        %1477 = vmatpush1.bf16.msra.mxu0 0
        %1478 = vmatprep.subr.bf16.mxu0 0
        %1479 = vmatpush1.bf16.msra.mxu0 0
        %1480 = vmatprep.mubr.bf16.mxu0 0
        %1481 = vmatmul.mubr.bf16.gmra.mrb[0].mxu0 %v1443
        %v1482 = vpop.f32.mrb[0].mxu0
        %v1483 = vadd.f32 0.0, %v1482
        %v1484 = vpop.f32.mrb[0].mxu0
        %v1485 = vpop.f32.mrb[0].mxu0
        %v1486 = vadd.f32 0.0, %v1485
        %v1487 = vpop.f32.mrb[0].mxu0
        %1488 = vdwg.mxu0
        %v1489 = vmax.f32 %v1483, 0.0
        %v1490 = vmax.f32 %v1486, 0.0
        %1493 = vrot.lane.b32.xlu0 %v1489, 8
        %v1494 = vpop.permute.xlu0 %1493
        %1495 = vrot.lane.b32.xlu0 %v1490, 8
        %v1496 = vpop.permute.xlu0 %1495
        %vm1499 = vcmask 97344
        %1500 = vst.msk [vmem:[%s619] sm:$0xff] %vm1499, %v1494
        %vm1501 = vcmask 93248
        %1502 = vst.msk [vmem:[%s619 + $0x8] sm:$0xf] %vm1501, %v1496
        %1503 = vrot.lane.b32.xlu0 %v742, 116
        %v1504 = vpop.permute.xlu0 %1503
        %v1506 = vsel %vm1105, %v1318, 0
        %v1509 = vsel %vm1326, %v1504, 0
        %1511 = vmatprep.subr.bf16.mxu0 0
        %1512 = vmatpush1.bf16.msra.mxu0 %v1509
        %1513 = vmatprep.subr.bf16.mxu0 0
        %1514 = vmatpush1.bf16.msra.mxu0 0
        %1515 = vmatprep.subr.bf16.mxu0 0
        %1516 = vmatpush1.bf16.msra.mxu0 0
        %1517 = vmatprep.subr.bf16.mxu0 0
        %1518 = vmatpush1.bf16.msra.mxu0 0
        %1519 = vmatprep.subr.bf16.mxu0 0
        %1520 = vmatpush1.bf16.msra.mxu0 0
        %1521 = vmatprep.subr.bf16.mxu0 0
        %1522 = vmatpush1.bf16.msra.mxu0 0
        %1523 = vmatprep.subr.bf16.mxu0 0
        %1524 = vmatpush1.bf16.msra.mxu0 0
        %1525 = vmatprep.subr.bf16.mxu0 0
        %1526 = vmatpush1.bf16.msra.mxu0 0
        %1527 = vmatprep.subr.bf16.mxu0 0
        %1528 = vmatpush1.bf16.msra.mxu0 0
        %1529 = vmatprep.subr.bf16.mxu0 0
        %1530 = vmatpush1.bf16.msra.mxu0 0
        %1531 = vmatprep.subr.bf16.mxu0 0
        %1532 = vmatpush1.bf16.msra.mxu0 0
        %1533 = vmatprep.subr.bf16.mxu0 0
        %1534 = vmatpush1.bf16.msra.mxu0 0
        %1535 = vmatprep.subr.bf16.mxu0 0
        %1536 = vmatpush1.bf16.msra.mxu0 0
        %1537 = vmatprep.subr.bf16.mxu0 0
        %1538 = vmatpush1.bf16.msra.mxu0 0
        %1539 = vmatprep.subr.bf16.mxu0 0
        %1540 = vmatpush1.bf16.msra.mxu0 0
        %1541 = vmatprep.subr.bf16.mxu0 0
        %1542 = vmatpush1.bf16.msra.mxu0 0
        %1543 = vmatprep.mubr.bf16.mxu0 0
        %1544 = vmatmul.mubr.bf16.gmra.mrb[0].mxu0 %v1506
        %v1545 = vpop.f32.mrb[0].mxu0
        %v1546 = vadd.f32 0.0, %v1545
        %v1547 = vpop.f32.mrb[0].mxu0
        %v1548 = vpop.f32.mrb[0].mxu0
        %v1549 = vadd.f32 0.0, %v1548
        %v1550 = vpop.f32.mrb[0].mxu0
        %1551 = vdwg.mxu0
        %v1552 = vmax.f32 %v1546, 0.0
        %v1553 = vmax.f32 %v1549, 0.0
        %1556 = vrot.lane.b32.xlu0 %v1552, 12
        %v1557 = vpop.permute.xlu0 %1556
        %1558 = vrot.lane.b32.xlu0 %v1553, 12
        %v1559 = vpop.permute.xlu0 %1558
        %vm1562 = vcmask 130144
        %1563 = vst.msk [vmem:[%s619] sm:$0xff] %vm1562, %v1557
        %vm1564 = vcmask 126048
        %1565 = vst.msk [vmem:[%s619 + $0x8] sm:$0xf] %vm1564, %v1559
        %1566 = vrot.lane.b32.xlu0 %v742, 112
        %v1567 = vpop.permute.xlu0 %1566
        %v1569 = vsel %vm1105, %v1319, 0
        %v1572 = vsel %vm1326, %v1567, 0
        %1574 = vmatprep.subr.bf16.mxu0 0
        %1575 = vmatpush1.bf16.msra.mxu0 %v1572
        %1576 = vmatprep.subr.bf16.mxu0 0
        %1577 = vmatpush1.bf16.msra.mxu0 0
        %1578 = vmatprep.subr.bf16.mxu0 0
        %1579 = vmatpush1.bf16.msra.mxu0 0
        %1580 = vmatprep.subr.bf16.mxu0 0
        %1581 = vmatpush1.bf16.msra.mxu0 0
        %1582 = vmatprep.subr.bf16.mxu0 0
        %1583 = vmatpush1.bf16.msra.mxu0 0
        %1584 = vmatprep.subr.bf16.mxu0 0
        %1585 = vmatpush1.bf16.msra.mxu0 0
        %1586 = vmatprep.subr.bf16.mxu0 0
        %1587 = vmatpush1.bf16.msra.mxu0 0
        %1588 = vmatprep.subr.bf16.mxu0 0
        %1589 = vmatpush1.bf16.msra.mxu0 0
        %1590 = vmatprep.subr.bf16.mxu0 0
        %1591 = vmatpush1.bf16.msra.mxu0 0
        %1592 = vmatprep.subr.bf16.mxu0 0
        %1593 = vmatpush1.bf16.msra.mxu0 0
        %1594 = vmatprep.subr.bf16.mxu0 0
        %1595 = vmatpush1.bf16.msra.mxu0 0
        %1596 = vmatprep.subr.bf16.mxu0 0
        %1597 = vmatpush1.bf16.msra.mxu0 0
        %1598 = vmatprep.subr.bf16.mxu0 0
        %1599 = vmatpush1.bf16.msra.mxu0 0
        %1600 = vmatprep.subr.bf16.mxu0 0
        %1601 = vmatpush1.bf16.msra.mxu0 0
        %1602 = vmatprep.subr.bf16.mxu0 0
        %1603 = vmatpush1.bf16.msra.mxu0 0
        %1604 = vmatprep.subr.bf16.mxu0 0
        %1605 = vmatpush1.bf16.msra.mxu0 0
        %1606 = vmatprep.mubr.bf16.mxu0 0
        %1607 = vmatmul.mubr.bf16.gmra.mrb[0].mxu0 %v1569
        %v1608 = vpop.f32.mrb[0].mxu0
        %v1609 = vadd.f32 0.0, %v1608
        %v1610 = vpop.f32.mrb[0].mxu0
        %v1611 = vpop.f32.mrb[0].mxu0
        %v1612 = vadd.f32 0.0, %v1611
        %v1613 = vpop.f32.mrb[0].mxu0
        %1614 = vdwg.mxu0
        %v1615 = vmax.f32 %v1609, 0.0
        %v1616 = vmax.f32 %v1612, 0.0
        %1619 = vrot.lane.b32.xlu0 %v1615, 16
        %v1620 = vpop.permute.xlu0 %1619
        %1621 = vrot.lane.b32.xlu0 %v1616, 16
        %v1622 = vpop.permute.xlu0 %1621
        %vm1625 = vcmask 162944
        %1626 = vst.msk [vmem:[%s619] sm:$0xff] %vm1625, %v1620
        %vm1627 = vcmask 158848
        %1628 = vst.msk [vmem:[%s619 + $0x8] sm:$0xf] %vm1627, %v1622
        %1629 = vrot.lane.b32.xlu0 %v742, 108
        %v1630 = vpop.permute.xlu0 %1629
        %v1632 = vsel %vm1105, %v1320, 0
        %v1635 = vsel %vm1326, %v1630, 0
        %1637 = vmatprep.subr.bf16.mxu0 0
        %1638 = vmatpush1.bf16.msra.mxu0 %v1635
        %1639 = vmatprep.subr.bf16.mxu0 0
        %1640 = vmatpush1.bf16.msra.mxu0 0
        %1641 = vmatprep.subr.bf16.mxu0 0
        %1642 = vmatpush1.bf16.msra.mxu0 0
        %1643 = vmatprep.subr.bf16.mxu0 0
        %1644 = vmatpush1.bf16.msra.mxu0 0
        %1645 = vmatprep.subr.bf16.mxu0 0
        %1646 = vmatpush1.bf16.msra.mxu0 0
        %1647 = vmatprep.subr.bf16.mxu0 0
        %1648 = vmatpush1.bf16.msra.mxu0 0
        %1649 = vmatprep.subr.bf16.mxu0 0
        %1650 = vmatpush1.bf16.msra.mxu0 0
        %1651 = vmatprep.subr.bf16.mxu0 0
        %1652 = vmatpush1.bf16.msra.mxu0 0
        %1653 = vmatprep.subr.bf16.mxu0 0
        %1654 = vmatpush1.bf16.msra.mxu0 0
        %1655 = vmatprep.subr.bf16.mxu0 0
        %1656 = vmatpush1.bf16.msra.mxu0 0
        %1657 = vmatprep.subr.bf16.mxu0 0
        %1658 = vmatpush1.bf16.msra.mxu0 0
        %1659 = vmatprep.subr.bf16.mxu0 0
        %1660 = vmatpush1.bf16.msra.mxu0 0
        %1661 = vmatprep.subr.bf16.mxu0 0
        %1662 = vmatpush1.bf16.msra.mxu0 0
        %1663 = vmatprep.subr.bf16.mxu0 0
        %1664 = vmatpush1.bf16.msra.mxu0 0
        %1665 = vmatprep.subr.bf16.mxu0 0
        %1666 = vmatpush1.bf16.msra.mxu0 0
        %1667 = vmatprep.subr.bf16.mxu0 0
        %1668 = vmatpush1.bf16.msra.mxu0 0
        %1669 = vmatprep.mubr.bf16.mxu0 0
        %1670 = vmatmul.mubr.bf16.gmra.mrb[0].mxu0 %v1632
        %v1671 = vpop.f32.mrb[0].mxu0
        %v1672 = vadd.f32 0.0, %v1671
        %v1673 = vpop.f32.mrb[0].mxu0
        %v1674 = vpop.f32.mrb[0].mxu0
        %v1675 = vadd.f32 0.0, %v1674
        %v1676 = vpop.f32.mrb[0].mxu0
        %1677 = vdwg.mxu0
        %v1678 = vmax.f32 %v1672, 0.0
        %v1679 = vmax.f32 %v1675, 0.0
        %1682 = vrot.lane.b32.xlu0 %v1678, 20
        %v1683 = vpop.permute.xlu0 %1682
        %1684 = vrot.lane.b32.xlu0 %v1679, 20
        %v1685 = vpop.permute.xlu0 %1684
        %vm1688 = vcmask 195744
        %1689 = vst.msk [vmem:[%s619] sm:$0xff] %vm1688, %v1683
        %vm1690 = vcmask 191648
        %1691 = vst.msk [vmem:[%s619 + $0x8] sm:$0xf] %vm1690, %v1685
        %1692 = vrot.lane.b32.xlu0 %v742, 104
        %v1693 = vpop.permute.xlu0 %1692
        %v1695 = vsel %vm1105, %v1321, 0
        %v1698 = vsel %vm1326, %v1693, 0
        %1700 = vmatprep.subr.bf16.mxu0 0
        %1701 = vmatpush1.bf16.msra.mxu0 %v1698
        %1702 = vmatprep.subr.bf16.mxu0 0
        %1703 = vmatpush1.bf16.msra.mxu0 0
        %1704 = vmatprep.subr.bf16.mxu0 0
        %1705 = vmatpush1.bf16.msra.mxu0 0
        %1706 = vmatprep.subr.bf16.mxu0 0
        %1707 = vmatpush1.bf16.msra.mxu0 0
        %1708 = vmatprep.subr.bf16.mxu0 0
        %1709 = vmatpush1.bf16.msra.mxu0 0
        %1710 = vmatprep.subr.bf16.mxu0 0
        %1711 = vmatpush1.bf16.msra.mxu0 0
        %1712 = vmatprep.subr.bf16.mxu0 0
        %1713 = vmatpush1.bf16.msra.mxu0 0
        %1714 = vmatprep.subr.bf16.mxu0 0
        %1715 = vmatpush1.bf16.msra.mxu0 0
        %1716 = vmatprep.subr.bf16.mxu0 0
        %1717 = vmatpush1.bf16.msra.mxu0 0
        %1718 = vmatprep.subr.bf16.mxu0 0
        %1719 = vmatpush1.bf16.msra.mxu0 0
        %1720 = vmatprep.subr.bf16.mxu0 0
        %1721 = vmatpush1.bf16.msra.mxu0 0
        %1722 = vmatprep.subr.bf16.mxu0 0
        %1723 = vmatpush1.bf16.msra.mxu0 0
        %1724 = vmatprep.subr.bf16.mxu0 0
        %1725 = vmatpush1.bf16.msra.mxu0 0
        %1726 = vmatprep.subr.bf16.mxu0 0
        %1727 = vmatpush1.bf16.msra.mxu0 0
        %1728 = vmatprep.subr.bf16.mxu0 0
        %1729 = vmatpush1.bf16.msra.mxu0 0
        %1730 = vmatprep.subr.bf16.mxu0 0
        %1731 = vmatpush1.bf16.msra.mxu0 0
        %1732 = vmatprep.mubr.bf16.mxu0 0
        %1733 = vmatmul.mubr.bf16.gmra.mrb[0].mxu0 %v1695
        %v1734 = vpop.f32.mrb[0].mxu0
        %v1735 = vadd.f32 0.0, %v1734
        %v1736 = vpop.f32.mrb[0].mxu0
        %v1737 = vpop.f32.mrb[0].mxu0
        %v1738 = vadd.f32 0.0, %v1737
        %v1739 = vpop.f32.mrb[0].mxu0
        %1740 = vdwg.mxu0
        %v1741 = vmax.f32 %v1735, 0.0
        %v1742 = vmax.f32 %v1738, 0.0
        %1745 = vrot.lane.b32.xlu0 %v1741, 24
        %v1746 = vpop.permute.xlu0 %1745
        %1747 = vrot.lane.b32.xlu0 %v1742, 24
        %v1748 = vpop.permute.xlu0 %1747
        %vm1751 = vcmask 228544
        %1752 = vst.msk [vmem:[%s619] sm:$0xff] %vm1751, %v1746
        %vm1753 = vcmask 224448
        %1754 = vst.msk [vmem:[%s619 + $0x8] sm:$0xf] %vm1753, %v1748
        %1755 = vrot.lane.b32.xlu0 %v742, 100
        %v1756 = vpop.permute.xlu0 %1755
        %v1758 = vsel %vm1105, %v1322, 0
        %v1761 = vsel %vm1326, %v1756, 0
        %1763 = vmatprep.subr.bf16.mxu0 0
        %1764 = vmatpush1.bf16.msra.mxu0 %v1761
        %1765 = vmatprep.subr.bf16.mxu0 0
        %1766 = vmatpush1.bf16.msra.mxu0 0
        %1767 = vmatprep.subr.bf16.mxu0 0
        %1768 = vmatpush1.bf16.msra.mxu0 0
        %1769 = vmatprep.subr.bf16.mxu0 0
        %1770 = vmatpush1.bf16.msra.mxu0 0
        %1771 = vmatprep.subr.bf16.mxu0 0
        %1772 = vmatpush1.bf16.msra.mxu0 0
        %1773 = vmatprep.subr.bf16.mxu0 0
        %1774 = vmatpush1.bf16.msra.mxu0 0
        %1775 = vmatprep.subr.bf16.mxu0 0
        %1776 = vmatpush1.bf16.msra.mxu0 0
        %1777 = vmatprep.subr.bf16.mxu0 0
        %1778 = vmatpush1.bf16.msra.mxu0 0
        %1779 = vmatprep.subr.bf16.mxu0 0
        %1780 = vmatpush1.bf16.msra.mxu0 0
        %1781 = vmatprep.subr.bf16.mxu0 0
        %1782 = vmatpush1.bf16.msra.mxu0 0
        %1783 = vmatprep.subr.bf16.mxu0 0
        %1784 = vmatpush1.bf16.msra.mxu0 0
        %1785 = vmatprep.subr.bf16.mxu0 0
        %1786 = vmatpush1.bf16.msra.mxu0 0
        %1787 = vmatprep.subr.bf16.mxu0 0
        %1788 = vmatpush1.bf16.msra.mxu0 0
        %1789 = vmatprep.subr.bf16.mxu0 0
        %1790 = vmatpush1.bf16.msra.mxu0 0
        %1791 = vmatprep.subr.bf16.mxu0 0
        %1792 = vmatpush1.bf16.msra.mxu0 0
        %1793 = vmatprep.subr.bf16.mxu0 0
        %1794 = vmatpush1.bf16.msra.mxu0 0
        %1795 = vmatprep.mubr.bf16.mxu0 0
        %1796 = vmatmul.mubr.bf16.gmra.mrb[0].mxu0 %v1758
        %v1797 = vpop.f32.mrb[0].mxu0
        %v1798 = vadd.f32 0.0, %v1797
        %v1799 = vpop.f32.mrb[0].mxu0
        %v1800 = vpop.f32.mrb[0].mxu0
        %v1801 = vadd.f32 0.0, %v1800
        %v1802 = vpop.f32.mrb[0].mxu0
        %1803 = vdwg.mxu0
        %v1804 = vmax.f32 %v1798, 0.0
        %v1805 = vmax.f32 %v1801, 0.0
        %1808 = vrot.lane.b32.xlu0 %v1804, 28
        %v1809 = vpop.permute.xlu0 %1808
        %1810 = vrot.lane.b32.xlu0 %v1805, 28
        %v1811 = vpop.permute.xlu0 %1810
        %vm1814 = vcmask 261344
        %1815 = vst.msk [vmem:[%s619] sm:$0xff] %vm1814, %v1809
        %vm1816 = vcmask 257248
        %1817 = vst.msk [vmem:[%s619 + $0x8] sm:$0xf] %vm1816, %v1811
        %s1818 = sand.u32 %s280, 1
        %s1819 = scalar_lea.sflag [#allocation4], %s1818
        %s1820 = sand.u32 %s280, 1
        %s1821 = smul.addr %s1820, 16
        %s1822 = scalar_lea.vmem [#allocation16], %s1821
        // Predicated region
        $region89: #{tpu_custom_call.1} parent=55 // pred_check
          %p1823 = pneg %p290
        $region90: #{tpu_custom_call.1} parent=55 // pred_check_branch
          %1825 = sbr.rel (%p1823) target = $region92
        $region91: #{tpu_custom_call.1} parent=55 // pred_region
          %s1827 = ssub.s32 256, 256
          %1828 = vsyncadd %s1819, %s1827
          %s1829 = smul.addr %s38, 2
          %s1830 = smul.addr %s1829, 128
          %s1831 = scalar_lea.hbm %s9, %s1830
          %s1832 = sshll.u32 %s1822, 4
          %s1833 = int_to_ptr.vmem [resolvable:$true] %s1832
          %1838 = dma.vmem_to_hbm [thread:$0]  %s1833, 256, %s1831, %s1819, 128, 128, 8
        $region92: #{tpu_custom_call.1} parent=55 // pred_fallthru
          _
      $region56: #{tpu_custom_call.1} parent=5 // pred_fallthru
        _
      %p1839 = scmp.le.s32.totalorder 2, %s33
      // Predicated region
      $region93: #{tpu_custom_call.1} parent=5 // pred_check
        %p1840 = pneg %p1839
      $region94: #{tpu_custom_call.1} parent=5 // pred_check_branch
        %1842 = sbr.rel (%p1840) target = $region96
      $region95: #{tpu_custom_call.1} parent=5 // pred_region
        %s1843 = ssub.s32 %s33, 2
        // Predicated region
        $region97: #{tpu_custom_call.1} parent=95 // pred_check
          %p1844 = pneg %p296
        $region98: #{tpu_custom_call.1} parent=95 // pred_check_branch
          %1846 = sbr.rel (%p1844) target = $region100
        $region99: #{tpu_custom_call.1} parent=95 // pred_region
          %s1847 = sand.u32 %s281, 1
          %s1848 = scalar_lea.sflag [#allocation4], %s1847
          %s1849 = sand.u32 %s281, 1
          %s1850 = smul.addr %s1849, 16
          %s1851 = scalar_lea.vmem [#allocation16], %s1850
          %1852 = dma.done %s1848, 256
        $region100: #{tpu_custom_call.1} parent=95 // pred_fallthru
          _
      $region96: #{tpu_custom_call.1} parent=5 // pred_fallthru
        _
    $region6: #{tpu_custom_call.1} parent=1 // loop_footer
      %s37 = sadd.s32 1, %s33
    $region7: #{tpu_custom_call.1} parent=1 // loop_footer_branch
      %32 = sbr.rel target = $region3
    $region8: #{tpu_custom_call.1} parent=1 // loop_exit
      _
    %1853 = vsyncpa [#allocation3], 1
    %s1854 = scalar_lea.sflag [#allocation3], 1
    %1855 = vsyncpa %s1854, 1
    %1856 = vsyncpa [#allocation6], 1
    %s1857 = scalar_lea.sflag [#allocation6], 1
    %1858 = vsyncpa %s1857, 1
    %1859 = vsyncpa [#allocation9], 1
    %s1860 = scalar_lea.sflag [#allocation9], 1
    %1861 = vsyncpa %s1860, 1
    %1862 = vsyncpa [#allocation12], 1
    %s1863 = scalar_lea.sflag [#allocation12], 1
    %1864 = vsyncpa %s1863, 1
    %1865 = vsyncpa [#allocation15], 1
    %s1866 = scalar_lea.sflag [#allocation15], 1
    %1867 = vsyncpa %s1866, 1
    %1868 = vsyncpa [#allocation4], 1
    %s1869 = scalar_lea.sflag [#allocation4], 1
    %1870 = vsyncpa %s1869, 1

</llo_original>
